<compile_context>
chip_gen: v6e
topology: v6e:2x2x1
jax: 0.10.0
libtpu: 0.0.40
codegen_flags: <defaults>
</compile_context>

<pallas_src>
import jax
import jax.numpy as jnp
from jax.experimental import pallas as pl
from jax.experimental.pallas import tpu as pltpu


def _round_up(n, m):
    return ((n + m - 1) // m) * m


def _pick_time_chunk(T, target):
    """Largest multiple-of-8 divisor of T that is <= target, else T itself."""
    target = max(1, min(int(target), T))
    if T <= target:
        return T
    best = None
    for c in range(8, target + 1, 8):
        if T % c == 0:
            best = c
    # TODO(synk): handle ragged T (no multiple-of-8 divisor) by masking a tail
    # chunk instead of falling back to a fully resident sequence.
    return best if best is not None else T


def _make_rnn_kernel(num_layers, activation, chunk, b_pad, compute_dtype):
    L = num_layers

    def kernel(*refs):
        x_ref = refs[0]                       # (chunk*b_pad, I)   compute_dtype
        wih_refs = refs[1:1 + L]              # (in_l, H)          compute_dtype
        whh_refs = refs[1 + L:1 + 2 * L]      # (H, H)             compute_dtype
        b_refs = refs[1 + 2 * L:1 + 3 * L]    # (1, H)             f32
        wfc_ref = refs[1 + 3 * L]             # (H, O_pad)         compute_dtype
        bfc_ref = refs[2 + 3 * L]             # (1, O_pad)         f32
        out_ref = refs[3 + 3 * L]             # (b_pad, O_pad)     f32
        h_ref = refs[4 + 3 * L]               # (L, b_pad, H)      f32  scratch
        xw_ref = refs[5 + 3 * L]              # (chunk*b_pad, H)   f32  scratch
        act_ref = refs[6 + 3 * L]             # (chunk*b_pad, H)   f32  scratch
        #                                       (only used when L > 1)

        t_blk = pl.program_id(0)

        @pl.when(t_blk == 0)
        def _init():
            h_ref[...] = jnp.zeros_like(h_ref)

        h_last = None
        for l in range(L):
            # ---- hoisted input projection + bias for the whole chunk:
            #      one batched MXU matmul per layer, off the recurrence chain.
            seq = x_ref[...] if l == 0 else act_ref[...].astype(compute_dtype)
            xw_ref[...] = (
                jnp.dot(seq, wih_refs[l][...],
                        preferred_element_type=jnp.float32)
                + b_refs[l][...])

            # ---- sequential recurrence over the chunk, fully unrolled.
            #      (W_hh is tiny here; for large H read tiles per step instead.)
            whh = whh_refs[l][...]
            h = h_ref[l]                      # (b_pad, H) f32
            for t in range(chunk):
                row = t * b_pad               # static, sublane-aligned offset
                pre = xw_ref[row:row + b_pad, :] + jnp.dot(
                    h.astype(compute_dtype), whh,
                    preferred_element_type=jnp.float32)
                h = jnp.tanh(pre)
                if l + 1 < L:
                    act_ref[row:row + b_pad, :] = h
            h_ref[l] = h
            h_last = h

        @pl.when(t_blk == pl.num_programs(0) - 1)
        def _head():
            y = jnp.dot(h_last.astype(compute_dtype), wfc_ref[...],
                        preferred_element_type=jnp.float32) + bfc_ref[...]
            if activation == 'relu':
                y = jnp.maximum(y, 0.0)
            else:  # 'tanh'
                y = jnp.tanh(y)
            out_ref[...] = y.astype(out_ref.dtype)

    return kernel


def rnn_forward(x, params, *, num_layers, activation,
                compute_dtype=jnp.float32, time_block=16):
    """x: (B, T, input_size) f32, batch_first like the PyTorch module.

    Returns (B, output_size) f32 == activation(fc(rnn(x)[:, -1, :])).
    """
    B, T, I = x.shape
    H = params['whh'][0].shape[0]
    O = params['wfc'].shape[1]

    b_pad = _round_up(B, 8)
    o_pad = _round_up(max(O, 128), 128)       # lane-dense head store
    chunk = _pick_time_chunk(T, time_block)
    n_blk = T // chunk
    cdt = compute_dtype

    # Pad batch to the f32 sublane count, go time-major, flatten to 2-D rows and
    # cast MXU operands; XLA fuses pad + transpose + reshape + cast into one
    # copy (the batch pad forces a copy of x anyway).
    x_p = jnp.pad(x.astype(jnp.float32), ((0, b_pad - B), (0, 0), (0, 0)))
    x_tm = jnp.transpose(x_p, (1, 0, 2)).reshape(T * b_pad, I).astype(cdt)

    wih = [w.astype(cdt) for w in params['wih']]
    whh = [w.astype(cdt) for w in params['whh']]
    bias = [b.astype(jnp.float32) for b in params['b']]                   # (1, H)
    wfc = jnp.pad(params['wfc'], ((0, 0), (0, o_pad - O))).astype(cdt)    # (H, o_pad)
    bfc = jnp.pad(params['bfc'], ((0, 0), (0, o_pad - O))).astype(jnp.float32)

    inputs = [x_tm] + wih + whh + bias + [wfc, bfc]

    in_specs = [pl.BlockSpec((chunk * b_pad, I), lambda t: (t, 0))]
    in_specs += [pl.BlockSpec(a.shape, lambda t: (0, 0)) for a in inputs[1:]]
    out_specs = pl.BlockSpec((b_pad, o_pad), lambda t: (0, 0))

    # Layer-output staging is only needed between stacked layers.
    act_rows = chunk * b_pad if num_layers > 1 else 8

    grid_spec = pltpu.PrefetchScalarGridSpec(
        num_scalar_prefetch=0,
        grid=(n_blk,),
        in_specs=in_specs,
        out_specs=out_specs,
        scratch_shapes=[
            pltpu.VMEM((num_layers, b_pad, H), jnp.float32),   # hidden state
            pltpu.VMEM((chunk * b_pad, H), jnp.float32),       # input projection
            pltpu.VMEM((act_rows, H), jnp.float32),            # layer outputs
        ],
    )

    kernel = _make_rnn_kernel(num_layers, activation, chunk, b_pad, cdt)
    out = pl.pallas_call(
        kernel,
        out_shape=jax.ShapeDtypeStruct((b_pad, o_pad), jnp.float32),
        grid_spec=grid_spec,
        compiler_params=pltpu.CompilerParams(
            # time axis carries the recurrence -> strictly sequential
            dimension_semantics=("arbitrary",)),
    )(*inputs)
    return out[:B, :O]


def init_params(key, input_size, hidden_size, num_layers, output_size):
    """Deterministic init mimicking PyTorch's U(-1/sqrt(H), 1/sqrt(H))."""
    k = 1.0 / jnp.sqrt(hidden_size)
    keys = jax.random.split(key, 4 * num_layers + 2)
    wih, whh, b = [], [], []
    for l in range(num_layers):
        in_dim = input_size if l == 0 else hidden_size
        k0, k1, k2, k3 = keys[4 * l:4 * l + 4]
        # stored transposed: (in_dim, H) and (H, H) so the kernel computes h @ W
        wih.append(jax.random.uniform(k0, (in_dim, hidden_size), jnp.float32, -k, k))
        whh.append(jax.random.uniform(k1, (hidden_size, hidden_size), jnp.float32, -k, k))
        b_ih = jax.random.uniform(k2, (1, hidden_size), jnp.float32, -k, k)
        b_hh = jax.random.uniform(k3, (1, hidden_size), jnp.float32, -k, k)
        b.append(b_ih + b_hh)  # biases always enter as a sum
    wfc = jax.random.uniform(keys[-2], (hidden_size, output_size), jnp.float32, -k, k)
    bfc = jax.random.uniform(keys[-1], (1, output_size), jnp.float32, -k, k)
    return {'wih': wih, 'whh': whh, 'b': b, 'wfc': wfc, 'bfc': bfc}


def rnn_reference(x_btI, params, *, num_layers, activation):
    """Pure-JAX reference matching nn.RNN(batch_first=True) + Linear + act."""
    B, T, _ = x_btI.shape
    H = params['whh'][0].shape[0]
    h = [jnp.zeros((B, H), jnp.float32) for _ in range(num_layers)]
    for t in range(T):
        inp = x_btI[:, t, :]
        for l in range(num_layers):
            h[l] = jnp.tanh(inp @ params['wih'][l] + h[l] @ params['whh'][l]
                            + params['b'][l])
            inp = h[l]
    y = h[-1] @ params['wfc'] + params['bfc']
    return jnp.maximum(y, 0.0) if activation == 'relu' else jnp.tanh(y)


if __name__ == "__main__":
    input_size, hidden_size, num_layers, output_size = 16, 32, 2, 8
    B, T = 2, 16

    key = jax.random.PRNGKey(0)
    kx, kp = jax.random.split(key)
    x = jax.random.normal(kx, (B, T, input_size), jnp.float32)
    params = init_params(kp, input_size, hidden_size, num_layers, output_size)

    # --- f32 path, ReLU head, streamed over 2 time blocks of 8 ---------------
    ref = rnn_reference(x, params, num_layers=num_layers, activation='relu')
    out = rnn_forward(x, params, num_layers=num_layers, activation='relu',
                      compute_dtype=jnp.float32, time_block=8)
    out = jax.block_until_ready(out)
    assert out.shape == (B, output_size)
    assert jnp.allclose(out, ref, atol=1e-4, rtol=1e-4), "f32/relu mismatch"

    # --- bf16 MXU operands (f32 accumulation + f32 tanh), loose tolerance ----
    out_bf16 = rnn_forward(x, params, num_layers=num_layers, activation='relu',
                           compute_dtype=jnp.bfloat16, time_block=8)
    out_bf16 = jax.block_until_ready(out_bf16)
    assert out_bf16.shape == (B, output_size)
    assert float(jnp.max(jnp.abs(out_bf16 - ref))) < 0.1, "bf16/relu drift"

    # --- f32 path, Tanh head, single time block (grid=1 path) ----------------
    ref_t = rnn_reference(x, params, num_layers=num_layers, activation='tanh')
    out_t = rnn_forward(x, params, num_layers=num_layers, activation='tanh',
                        compute_dtype=jnp.float32, time_block=16)
    out_t = jax.block_until_ready(out_t)
    assert jnp.allclose(out_t, ref_t, atol=1e-4, rtol=1e-4), "f32/tanh mismatch"

    # --- single-layer path (no inter-layer staging buffer) -------------------
    params1 = init_params(kp, input_size, hidden_size, 1, output_size)
    ref1 = rnn_reference(x, params1, num_layers=1, activation='relu')
    out1 = rnn_forward(x, params1, num_layers=1, activation='relu',
                       compute_dtype=jnp.float32, time_block=8)
    out1 = jax.block_until_ready(out1)
    assert jnp.allclose(out1, ref1, atol=1e-4, rtol=1e-4), "1-layer mismatch"

    print("KERNEL_OK")
</pallas_src>

<mosaic_0001>
module attributes {stable_mosaic.version = 11 : i64} {
  func.func @kernel(%arg0: i32, %arg1: memref<64x16xf32, #tpu.memory_space<vmem>>, %arg2: memref<16x32xf32, #tpu.memory_space<vmem>>, %arg3: memref<32x32xf32, #tpu.memory_space<vmem>>, %arg4: memref<32x32xf32, #tpu.memory_space<vmem>>, %arg5: memref<32x32xf32, #tpu.memory_space<vmem>>, %arg6: memref<1x32xf32, #tpu.memory_space<vmem>>, %arg7: memref<1x32xf32, #tpu.memory_space<vmem>>, %arg8: memref<32x128xf32, #tpu.memory_space<vmem>>, %arg9: memref<1x128xf32, #tpu.memory_space<vmem>>, %arg10: memref<8x128xf32, #tpu.memory_space<vmem>>, %arg11: memref<2x8x32xf32, #tpu.memory_space<vmem>>, %arg12: memref<64x32xf32, #tpu.memory_space<vmem>>, %arg13: memref<64x32xf32, #tpu.memory_space<vmem>>) attributes {dimension_semantics = [#tpu.dimension_semantics<arbitrary>], iteration_bounds = array<i64: 2>, scalar_prefetch = 0 : i64, scratch_operands = 3 : i64, tpu.core_type = #tpu.core_type<tc>, window_params = [{transform_indices = @transform_0, window_bounds = array<i64: 64, 16>}, {pipeline_mode = #tpu.pipeline_mode<synchronous>, transform_indices = @transform_1, window_bounds = array<i64: 16, 32>}, {pipeline_mode = #tpu.pipeline_mode<synchronous>, transform_indices = @transform_2, window_bounds = array<i64: 32, 32>}, {pipeline_mode = #tpu.pipeline_mode<synchronous>, transform_indices = @transform_3, window_bounds = array<i64: 32, 32>}, {pipeline_mode = #tpu.pipeline_mode<synchronous>, transform_indices = @transform_4, window_bounds = array<i64: 32, 32>}, {pipeline_mode = #tpu.pipeline_mode<synchronous>, transform_indices = @transform_5, window_bounds = array<i64: 1, 32>}, {pipeline_mode = #tpu.pipeline_mode<synchronous>, transform_indices = @transform_6, window_bounds = array<i64: 1, 32>}, {pipeline_mode = #tpu.pipeline_mode<synchronous>, transform_indices = @transform_7, window_bounds = array<i64: 32, 128>}, {pipeline_mode = #tpu.pipeline_mode<synchronous>, transform_indices = @transform_8, window_bounds = array<i64: 1, 128>}, {pipeline_mode = #tpu.pipeline_mode<synchronous>, transform_indices = @transform_9, window_bounds = array<i64: 8, 128>}]} {
    %c0_i32 = arith.constant 0 : i32
    %0 = arith.cmpi eq, %arg0, %c0_i32 : i32
    %1 = arith.extui %0 : i1 to i32
    %c0_i32_0 = arith.constant 0 : i32
    %2 = arith.cmpi ne, %1, %c0_i32_0 : i32
    scf.if %2 {
      %cst_90 = arith.constant 0.000000e+00 : f32
      %104 = vector.broadcast %cst_90 : f32 to vector<2x8x32xf32>
      %c0_91 = arith.constant 0 : index
      %c0_92 = arith.constant 0 : index
      %c0_93 = arith.constant 0 : index
      %105 = vector.load %arg11[%c0_91, %c0_92, %c0_93] : memref<2x8x32xf32, #tpu.memory_space<vmem>>, vector<2x8x32xf32>
      tpu.vector_store %arg11[%c0_91, %c0_92, %c0_93], %104 {strides = array<i32>} : memref<2x8x32xf32, #tpu.memory_space<vmem>>, vector<2x8x32xf32>,
    } else {
    }
    %c0 = arith.constant 0 : index
    %c0_1 = arith.constant 0 : index
    %3 = vector.load %arg1[%c0, %c0_1] : memref<64x16xf32, #tpu.memory_space<vmem>>, vector<64x16xf32>
    %c0_2 = arith.constant 0 : index
    %c0_3 = arith.constant 0 : index
    %4 = vector.load %arg2[%c0_2, %c0_3] : memref<16x32xf32, #tpu.memory_space<vmem>>, vector<16x32xf32>
    %cst = arith.constant dense<0.000000e+00> : vector<64x32xf32>
    %5 = tpu.matmul %3, %4, %cst {dimension_numbers = #tpu.dot_dimension_numbers<[1], [0], [0], [1], [0, 0, 1, 1], [], []>} : vector<64x16xf32>, vector<16x32xf32>, vector<64x32xf32> -> vector<64x32xf32>
    %c0_4 = arith.constant 0 : index
    %c0_5 = arith.constant 0 : index
    %6 = vector.load %arg6[%c0_4, %c0_5] : memref<1x32xf32, #tpu.memory_space<vmem>>, vector<1x32xf32>
    %7 = vector.broadcast %6 : vector<1x32xf32> to vector<64x32xf32>
    %8 = arith.addf %5, %7 : vector<64x32xf32>
    %c0_6 = arith.constant 0 : index
    %c0_7 = arith.constant 0 : index
    %9 = vector.load %arg12[%c0_6, %c0_7] : memref<64x32xf32, #tpu.memory_space<vmem>>, vector<64x32xf32>
    tpu.vector_store %arg12[%c0_6, %c0_7], %8 {strides = array<i32>} : memref<64x32xf32, #tpu.memory_space<vmem>>, vector<64x32xf32>,
    %c0_8 = arith.constant 0 : index
    %c0_9 = arith.constant 0 : index
    %10 = vector.load %arg4[%c0_8, %c0_9] : memref<32x32xf32, #tpu.memory_space<vmem>>, vector<32x32xf32>
    %c0_10 = arith.constant 0 : index
    %c0_11 = arith.constant 0 : index
    %c0_12 = arith.constant 0 : index
    %11 = vector.load %arg11[%c0_10, %c0_11, %c0_12] : memref<2x8x32xf32, #tpu.memory_space<vmem>>, vector<1x8x32xf32>
    %12 = vector.shape_cast %11 : vector<1x8x32xf32> to vector<8x32xf32>
    %c0_13 = arith.constant 0 : index
    %c0_14 = arith.constant 0 : index
    %13 = vector.load %arg12[%c0_13, %c0_14] : memref<64x32xf32, #tpu.memory_space<vmem>>, vector<8x32xf32>
    %cst_15 = arith.constant dense<0.000000e+00> : vector<8x32xf32>
    %14 = tpu.matmul %12, %10, %cst_15 {dimension_numbers = #tpu.dot_dimension_numbers<[1], [0], [0], [1], [0, 0, 1, 1], [], []>} : vector<8x32xf32>, vector<32x32xf32>, vector<8x32xf32> -> vector<8x32xf32>
    %15 = arith.addf %13, %14 : vector<8x32xf32>
    %16 = math.tanh %15 : vector<8x32xf32>
    %c0_16 = arith.constant 0 : index
    %c0_17 = arith.constant 0 : index
    %17 = vector.load %arg13[%c0_16, %c0_17] : memref<64x32xf32, #tpu.memory_space<vmem>>, vector<8x32xf32>
    tpu.vector_store %arg13[%c0_16, %c0_17], %16 {strides = array<i32>} : memref<64x32xf32, #tpu.memory_space<vmem>>, vector<8x32xf32>,
    %c8 = arith.constant 8 : index
    %c0_18 = arith.constant 0 : index
    %18 = vector.load %arg12[%c8, %c0_18] : memref<64x32xf32, #tpu.memory_space<vmem>>, vector<8x32xf32>
    %cst_19 = arith.constant dense<0.000000e+00> : vector<8x32xf32>
    %19 = tpu.matmul %16, %10, %cst_19 {dimension_numbers = #tpu.dot_dimension_numbers<[1], [0], [0], [1], [0, 0, 1, 1], [], []>} : vector<8x32xf32>, vector<32x32xf32>, vector<8x32xf32> -> vector<8x32xf32>
    %20 = arith.addf %18, %19 : vector<8x32xf32>
    %21 = math.tanh %20 : vector<8x32xf32>
    %c8_20 = arith.constant 8 : index
    %c0_21 = arith.constant 0 : index
    %22 = vector.load %arg13[%c8_20, %c0_21] : memref<64x32xf32, #tpu.memory_space<vmem>>, vector<8x32xf32>
    tpu.vector_store %arg13[%c8_20, %c0_21], %21 {strides = array<i32>} : memref<64x32xf32, #tpu.memory_space<vmem>>, vector<8x32xf32>,
    %c16 = arith.constant 16 : index
    %c0_22 = arith.constant 0 : index
    %23 = vector.load %arg12[%c16, %c0_22] : memref<64x32xf32, #tpu.memory_space<vmem>>, vector<8x32xf32>
    %cst_23 = arith.constant dense<0.000000e+00> : vector<8x32xf32>
    %24 = tpu.matmul %21, %10, %cst_23 {dimension_numbers = #tpu.dot_dimension_numbers<[1], [0], [0], [1], [0, 0, 1, 1], [], []>} : vector<8x32xf32>, vector<32x32xf32>, vector<8x32xf32> -> vector<8x32xf32>
    %25 = arith.addf %23, %24 : vector<8x32xf32>
    %26 = math.tanh %25 : vector<8x32xf32>
    %c16_24 = arith.constant 16 : index
    %c0_25 = arith.constant 0 : index
    %27 = vector.load %arg13[%c16_24, %c0_25] : memref<64x32xf32, #tpu.memory_space<vmem>>, vector<8x32xf32>
    tpu.vector_store %arg13[%c16_24, %c0_25], %26 {strides = array<i32>} : memref<64x32xf32, #tpu.memory_space<vmem>>, vector<8x32xf32>,
    %c24 = arith.constant 24 : index
    %c0_26 = arith.constant 0 : index
    %28 = vector.load %arg12[%c24, %c0_26] : memref<64x32xf32, #tpu.memory_space<vmem>>, vector<8x32xf32>
    %cst_27 = arith.constant dense<0.000000e+00> : vector<8x32xf32>
    %29 = tpu.matmul %26, %10, %cst_27 {dimension_numbers = #tpu.dot_dimension_numbers<[1], [0], [0], [1], [0, 0, 1, 1], [], []>} : vector<8x32xf32>, vector<32x32xf32>, vector<8x32xf32> -> vector<8x32xf32>
    %30 = arith.addf %28, %29 : vector<8x32xf32>
    %31 = math.tanh %30 : vector<8x32xf32>
    %c24_28 = arith.constant 24 : index
    %c0_29 = arith.constant 0 : index
    %32 = vector.load %arg13[%c24_28, %c0_29] : memref<64x32xf32, #tpu.memory_space<vmem>>, vector<8x32xf32>
    tpu.vector_store %arg13[%c24_28, %c0_29], %31 {strides = array<i32>} : memref<64x32xf32, #tpu.memory_space<vmem>>, vector<8x32xf32>,
    %c32 = arith.constant 32 : index
    %c0_30 = arith.constant 0 : index
    %33 = vector.load %arg12[%c32, %c0_30] : memref<64x32xf32, #tpu.memory_space<vmem>>, vector<8x32xf32>
    %cst_31 = arith.constant dense<0.000000e+00> : vector<8x32xf32>
    %34 = tpu.matmul %31, %10, %cst_31 {dimension_numbers = #tpu.dot_dimension_numbers<[1], [0], [0], [1], [0, 0, 1, 1], [], []>} : vector<8x32xf32>, vector<32x32xf32>, vector<8x32xf32> -> vector<8x32xf32>
    %35 = arith.addf %33, %34 : vector<8x32xf32>
    %36 = math.tanh %35 : vector<8x32xf32>
    %c32_32 = arith.constant 32 : index
    %c0_33 = arith.constant 0 : index
    %37 = vector.load %arg13[%c32_32, %c0_33] : memref<64x32xf32, #tpu.memory_space<vmem>>, vector<8x32xf32>
    tpu.vector_store %arg13[%c32_32, %c0_33], %36 {strides = array<i32>} : memref<64x32xf32, #tpu.memory_space<vmem>>, vector<8x32xf32>,
    %c40 = arith.constant 40 : index
    %c0_34 = arith.constant 0 : index
    %38 = vector.load %arg12[%c40, %c0_34] : memref<64x32xf32, #tpu.memory_space<vmem>>, vector<8x32xf32>
    %cst_35 = arith.constant dense<0.000000e+00> : vector<8x32xf32>
    %39 = tpu.matmul %36, %10, %cst_35 {dimension_numbers = #tpu.dot_dimension_numbers<[1], [0], [0], [1], [0, 0, 1, 1], [], []>} : vector<8x32xf32>, vector<32x32xf32>, vector<8x32xf32> -> vector<8x32xf32>
    %40 = arith.addf %38, %39 : vector<8x32xf32>
    %41 = math.tanh %40 : vector<8x32xf32>
    %c40_36 = arith.constant 40 : index
    %c0_37 = arith.constant 0 : index
    %42 = vector.load %arg13[%c40_36, %c0_37] : memref<64x32xf32, #tpu.memory_space<vmem>>, vector<8x32xf32>
    tpu.vector_store %arg13[%c40_36, %c0_37], %41 {strides = array<i32>} : memref<64x32xf32, #tpu.memory_space<vmem>>, vector<8x32xf32>,
    %c48 = arith.constant 48 : index
    %c0_38 = arith.constant 0 : index
    %43 = vector.load %arg12[%c48, %c0_38] : memref<64x32xf32, #tpu.memory_space<vmem>>, vector<8x32xf32>
    %cst_39 = arith.constant dense<0.000000e+00> : vector<8x32xf32>
    %44 = tpu.matmul %41, %10, %cst_39 {dimension_numbers = #tpu.dot_dimension_numbers<[1], [0], [0], [1], [0, 0, 1, 1], [], []>} : vector<8x32xf32>, vector<32x32xf32>, vector<8x32xf32> -> vector<8x32xf32>
    %45 = arith.addf %43, %44 : vector<8x32xf32>
    %46 = math.tanh %45 : vector<8x32xf32>
    %c48_40 = arith.constant 48 : index
    %c0_41 = arith.constant 0 : index
    %47 = vector.load %arg13[%c48_40, %c0_41] : memref<64x32xf32, #tpu.memory_space<vmem>>, vector<8x32xf32>
    tpu.vector_store %arg13[%c48_40, %c0_41], %46 {strides = array<i32>} : memref<64x32xf32, #tpu.memory_space<vmem>>, vector<8x32xf32>,
    %c56 = arith.constant 56 : index
    %c0_42 = arith.constant 0 : index
    %48 = vector.load %arg12[%c56, %c0_42] : memref<64x32xf32, #tpu.memory_space<vmem>>, vector<8x32xf32>
    %cst_43 = arith.constant dense<0.000000e+00> : vector<8x32xf32>
    %49 = tpu.matmul %46, %10, %cst_43 {dimension_numbers = #tpu.dot_dimension_numbers<[1], [0], [0], [1], [0, 0, 1, 1], [], []>} : vector<8x32xf32>, vector<32x32xf32>, vector<8x32xf32> -> vector<8x32xf32>
    %50 = arith.addf %48, %49 : vector<8x32xf32>
    %51 = math.tanh %50 : vector<8x32xf32>
    %c56_44 = arith.constant 56 : index
    %c0_45 = arith.constant 0 : index
    %52 = vector.load %arg13[%c56_44, %c0_45] : memref<64x32xf32, #tpu.memory_space<vmem>>, vector<8x32xf32>
    tpu.vector_store %arg13[%c56_44, %c0_45], %51 {strides = array<i32>} : memref<64x32xf32, #tpu.memory_space<vmem>>, vector<8x32xf32>,
    %c0_46 = arith.constant 0 : index
    %c0_47 = arith.constant 0 : index
    %c0_48 = arith.constant 0 : index
    %53 = vector.load %arg11[%c0_46, %c0_47, %c0_48] : memref<2x8x32xf32, #tpu.memory_space<vmem>>, vector<1x8x32xf32>
    %54 = vector.shape_cast %53 : vector<1x8x32xf32> to vector<8x32xf32>
    %55 = vector.shape_cast %51 : vector<8x32xf32> to vector<1x8x32xf32>
    tpu.vector_store %arg11[%c0_46, %c0_47, %c0_48], %55 {strides = array<i32>} : memref<2x8x32xf32, #tpu.memory_space<vmem>>, vector<1x8x32xf32>,
    %c0_49 = arith.constant 0 : index
    %c0_50 = arith.constant 0 : index
    %56 = vector.load %arg13[%c0_49, %c0_50] : memref<64x32xf32, #tpu.memory_space<vmem>>, vector<64x32xf32>
    %c0_51 = arith.constant 0 : index
    %c0_52 = arith.constant 0 : index
    %57 = vector.load %arg3[%c0_51, %c0_52] : memref<32x32xf32, #tpu.memory_space<vmem>>, vector<32x32xf32>
    %cst_53 = arith.constant dense<0.000000e+00> : vector<64x32xf32>
    %58 = tpu.matmul %56, %57, %cst_53 {dimension_numbers = #tpu.dot_dimension_numbers<[1], [0], [0], [1], [0, 0, 1, 1], [], []>} : vector<64x32xf32>, vector<32x32xf32>, vector<64x32xf32> -> vector<64x32xf32>
    %c0_54 = arith.constant 0 : index
    %c0_55 = arith.constant 0 : index
    %59 = vector.load %arg7[%c0_54, %c0_55] : memref<1x32xf32, #tpu.memory_space<vmem>>, vector<1x32xf32>
    %60 = vector.broadcast %59 : vector<1x32xf32> to vector<64x32xf32>
    %61 = arith.addf %58, %60 : vector<64x32xf32>
    %c0_56 = arith.constant 0 : index
    %c0_57 = arith.constant 0 : index
    %62 = vector.load %arg12[%c0_56, %c0_57] : memref<64x32xf32, #tpu.memory_space<vmem>>, vector<64x32xf32>
    tpu.vector_store %arg12[%c0_56, %c0_57], %61 {strides = array<i32>} : memref<64x32xf32, #tpu.memory_space<vmem>>, vector<64x32xf32>,
    %c0_58 = arith.constant 0 : index
    %c0_59 = arith.constant 0 : index
    %63 = vector.load %arg5[%c0_58, %c0_59] : memref<32x32xf32, #tpu.memory_space<vmem>>, vector<32x32xf32>
    %c1 = arith.constant 1 : index
    %c0_60 = arith.constant 0 : index
    %c0_61 = arith.constant 0 : index
    %64 = vector.load %arg11[%c1, %c0_60, %c0_61] : memref<2x8x32xf32, #tpu.memory_space<vmem>>, vector<1x8x32xf32>
    %65 = vector.shape_cast %64 : vector<1x8x32xf32> to vector<8x32xf32>
    %c0_62 = arith.constant 0 : index
    %c0_63 = arith.constant 0 : index
    %66 = vector.load %arg12[%c0_62, %c0_63] : memref<64x32xf32, #tpu.memory_space<vmem>>, vector<8x32xf32>
    %cst_64 = arith.constant dense<0.000000e+00> : vector<8x32xf32>
    %67 = tpu.matmul %65, %63, %cst_64 {dimension_numbers = #tpu.dot_dimension_numbers<[1], [0], [0], [1], [0, 0, 1, 1], [], []>} : vector<8x32xf32>, vector<32x32xf32>, vector<8x32xf32> -> vector<8x32xf32>
    %68 = arith.addf %66, %67 : vector<8x32xf32>
    %69 = math.tanh %68 : vector<8x32xf32>
    %c8_65 = arith.constant 8 : index
    %c0_66 = arith.constant 0 : index
    %70 = vector.load %arg12[%c8_65, %c0_66] : memref<64x32xf32, #tpu.memory_space<vmem>>, vector<8x32xf32>
    %cst_67 = arith.constant dense<0.000000e+00> : vector<8x32xf32>
    %71 = tpu.matmul %69, %63, %cst_67 {dimension_numbers = #tpu.dot_dimension_numbers<[1], [0], [0], [1], [0, 0, 1, 1], [], []>} : vector<8x32xf32>, vector<32x32xf32>, vector<8x32xf32> -> vector<8x32xf32>
    %72 = arith.addf %70, %71 : vector<8x32xf32>
    %73 = math.tanh %72 : vector<8x32xf32>
    %c16_68 = arith.constant 16 : index
    %c0_69 = arith.constant 0 : index
    %74 = vector.load %arg12[%c16_68, %c0_69] : memref<64x32xf32, #tpu.memory_space<vmem>>, vector<8x32xf32>
    %cst_70 = arith.constant dense<0.000000e+00> : vector<8x32xf32>
    %75 = tpu.matmul %73, %63, %cst_70 {dimension_numbers = #tpu.dot_dimension_numbers<[1], [0], [0], [1], [0, 0, 1, 1], [], []>} : vector<8x32xf32>, vector<32x32xf32>, vector<8x32xf32> -> vector<8x32xf32>
    %76 = arith.addf %74, %75 : vector<8x32xf32>
    %77 = math.tanh %76 : vector<8x32xf32>
    %c24_71 = arith.constant 24 : index
    %c0_72 = arith.constant 0 : index
    %78 = vector.load %arg12[%c24_71, %c0_72] : memref<64x32xf32, #tpu.memory_space<vmem>>, vector<8x32xf32>
    %cst_73 = arith.constant dense<0.000000e+00> : vector<8x32xf32>
    %79 = tpu.matmul %77, %63, %cst_73 {dimension_numbers = #tpu.dot_dimension_numbers<[1], [0], [0], [1], [0, 0, 1, 1], [], []>} : vector<8x32xf32>, vector<32x32xf32>, vector<8x32xf32> -> vector<8x32xf32>
    %80 = arith.addf %78, %79 : vector<8x32xf32>
    %81 = math.tanh %80 : vector<8x32xf32>
    %c32_74 = arith.constant 32 : index
    %c0_75 = arith.constant 0 : index
    %82 = vector.load %arg12[%c32_74, %c0_75] : memref<64x32xf32, #tpu.memory_space<vmem>>, vector<8x32xf32>
    %cst_76 = arith.constant dense<0.000000e+00> : vector<8x32xf32>
    %83 = tpu.matmul %81, %63, %cst_76 {dimension_numbers = #tpu.dot_dimension_numbers<[1], [0], [0], [1], [0, 0, 1, 1], [], []>} : vector<8x32xf32>, vector<32x32xf32>, vector<8x32xf32> -> vector<8x32xf32>
    %84 = arith.addf %82, %83 : vector<8x32xf32>
    %85 = math.tanh %84 : vector<8x32xf32>
    %c40_77 = arith.constant 40 : index
    %c0_78 = arith.constant 0 : index
    %86 = vector.load %arg12[%c40_77, %c0_78] : memref<64x32xf32, #tpu.memory_space<vmem>>, vector<8x32xf32>
    %cst_79 = arith.constant dense<0.000000e+00> : vector<8x32xf32>
    %87 = tpu.matmul %85, %63, %cst_79 {dimension_numbers = #tpu.dot_dimension_numbers<[1], [0], [0], [1], [0, 0, 1, 1], [], []>} : vector<8x32xf32>, vector<32x32xf32>, vector<8x32xf32> -> vector<8x32xf32>
    %88 = arith.addf %86, %87 : vector<8x32xf32>
    %89 = math.tanh %88 : vector<8x32xf32>
    %c48_80 = arith.constant 48 : index
    %c0_81 = arith.constant 0 : index
    %90 = vector.load %arg12[%c48_80, %c0_81] : memref<64x32xf32, #tpu.memory_space<vmem>>, vector<8x32xf32>
    %cst_82 = arith.constant dense<0.000000e+00> : vector<8x32xf32>
    %91 = tpu.matmul %89, %63, %cst_82 {dimension_numbers = #tpu.dot_dimension_numbers<[1], [0], [0], [1], [0, 0, 1, 1], [], []>} : vector<8x32xf32>, vector<32x32xf32>, vector<8x32xf32> -> vector<8x32xf32>
    %92 = arith.addf %90, %91 : vector<8x32xf32>
    %93 = math.tanh %92 : vector<8x32xf32>
    %c56_83 = arith.constant 56 : index
    %c0_84 = arith.constant 0 : index
    %94 = vector.load %arg12[%c56_83, %c0_84] : memref<64x32xf32, #tpu.memory_space<vmem>>, vector<8x32xf32>
    %cst_85 = arith.constant dense<0.000000e+00> : vector<8x32xf32>
    %95 = tpu.matmul %93, %63, %cst_85 {dimension_numbers = #tpu.dot_dimension_numbers<[1], [0], [0], [1], [0, 0, 1, 1], [], []>} : vector<8x32xf32>, vector<32x32xf32>, vector<8x32xf32> -> vector<8x32xf32>
    %96 = arith.addf %94, %95 : vector<8x32xf32>
    %97 = math.tanh %96 : vector<8x32xf32>
    %c1_86 = arith.constant 1 : index
    %c0_87 = arith.constant 0 : index
    %c0_88 = arith.constant 0 : index
    %98 = vector.load %arg11[%c1_86, %c0_87, %c0_88] : memref<2x8x32xf32, #tpu.memory_space<vmem>>, vector<1x8x32xf32>
    %99 = vector.shape_cast %98 : vector<1x8x32xf32> to vector<8x32xf32>
    %100 = vector.shape_cast %97 : vector<8x32xf32> to vector<1x8x32xf32>
    tpu.vector_store %arg11[%c1_86, %c0_87, %c0_88], %100 {strides = array<i32>} : memref<2x8x32xf32, #tpu.memory_space<vmem>>, vector<1x8x32xf32>,
    %c1_i32 = arith.constant 1 : i32
    %101 = arith.cmpi eq, %arg0, %c1_i32 : i32
    %102 = arith.extui %101 : i1 to i32
    %c0_i32_89 = arith.constant 0 : i32
    %103 = arith.cmpi ne, %102, %c0_i32_89 : i32
    scf.if %103 {
      %c0_90 = arith.constant 0 : index
      %c0_91 = arith.constant 0 : index
      %104 = vector.load %arg8[%c0_90, %c0_91] : memref<32x128xf32, #tpu.memory_space<vmem>>, vector<32x128xf32>
      %cst_92 = arith.constant dense<0.000000e+00> : vector<8x128xf32>
      %105 = tpu.matmul %97, %104, %cst_92 {dimension_numbers = #tpu.dot_dimension_numbers<[1], [0], [0], [1], [0, 0, 1, 1], [], []>} : vector<8x32xf32>, vector<32x128xf32>, vector<8x128xf32> -> vector<8x128xf32>
      %c0_93 = arith.constant 0 : index
      %c0_94 = arith.constant 0 : index
      %106 = vector.load %arg9[%c0_93, %c0_94] : memref<1x128xf32, #tpu.memory_space<vmem>>, vector<1x128xf32>
      %107 = vector.broadcast %106 : vector<1x128xf32> to vector<8x128xf32>
      %108 = arith.addf %105, %107 : vector<8x128xf32>
      %cst_95 = arith.constant 0.000000e+00 : f32
      %109 = vector.broadcast %cst_95 : f32 to vector<8x128xf32>
      %110 = arith.maximumf %108, %109 : vector<8x128xf32>
      %c0_96 = arith.constant 0 : index
      %c0_97 = arith.constant 0 : index
      %111 = vector.load %arg10[%c0_96, %c0_97] : memref<8x128xf32, #tpu.memory_space<vmem>>, vector<8x128xf32>
      tpu.vector_store %arg10[%c0_96, %c0_97], %110 {strides = array<i32>} : memref<8x128xf32, #tpu.memory_space<vmem>>, vector<8x128xf32>,
    } else {
    }
    return
  }
  func.func @transform_0(%arg0: i32) -> (i32, i32) {
    %c0_i32 = arith.constant 0 : i32
    %c0_i32_0 = arith.constant 0 : i32
    return %arg0, %c0_i32 : i32, i32
  }
  func.func @transform_1(%arg0: i32) -> (i32, i32) {
    %c0_i32 = arith.constant 0 : i32
    %c0_i32_0 = arith.constant 0 : i32
    %c0_i32_1 = arith.constant 0 : i32
    return %c0_i32, %c0_i32_0 : i32, i32
  }
  func.func @transform_2(%arg0: i32) -> (i32, i32) {
    %c0_i32 = arith.constant 0 : i32
    %c0_i32_0 = arith.constant 0 : i32
    %c0_i32_1 = arith.constant 0 : i32
    return %c0_i32, %c0_i32_0 : i32, i32
  }
  func.func @transform_3(%arg0: i32) -> (i32, i32) {
    %c0_i32 = arith.constant 0 : i32
    %c0_i32_0 = arith.constant 0 : i32
    %c0_i32_1 = arith.constant 0 : i32
    return %c0_i32, %c0_i32_0 : i32, i32
  }
  func.func @transform_4(%arg0: i32) -> (i32, i32) {
    %c0_i32 = arith.constant 0 : i32
    %c0_i32_0 = arith.constant 0 : i32
    %c0_i32_1 = arith.constant 0 : i32
    return %c0_i32, %c0_i32_0 : i32, i32
  }
  func.func @transform_5(%arg0: i32) -> (i32, i32) {
    %c0_i32 = arith.constant 0 : i32
    %c0_i32_0 = arith.constant 0 : i32
    %c0_i32_1 = arith.constant 0 : i32
    return %c0_i32, %c0_i32_0 : i32, i32
  }
  func.func @transform_6(%arg0: i32) -> (i32, i32) {
    %c0_i32 = arith.constant 0 : i32
    %c0_i32_0 = arith.constant 0 : i32
    %c0_i32_1 = arith.constant 0 : i32
    return %c0_i32, %c0_i32_0 : i32, i32
  }
  func.func @transform_7(%arg0: i32) -> (i32, i32) {
    %c0_i32 = arith.constant 0 : i32
    %c0_i32_0 = arith.constant 0 : i32
    %c0_i32_1 = arith.constant 0 : i32
    return %c0_i32, %c0_i32_0 : i32, i32
  }
  func.func @transform_8(%arg0: i32) -> (i32, i32) {
    %c0_i32 = arith.constant 0 : i32
    %c0_i32_0 = arith.constant 0 : i32
    %c0_i32_1 = arith.constant 0 : i32
    return %c0_i32, %c0_i32_0 : i32, i32
  }
  func.func @transform_9(%arg0: i32) -> (i32, i32) {
    %c0_i32 = arith.constant 0 : i32
    %c0_i32_0 = arith.constant 0 : i32
    %c0_i32_1 = arith.constant 0 : i32
    return %c0_i32, %c0_i32_0 : i32, i32
  }
}

</mosaic_0001>

<llo_original>
// kernel: tpu_custom_call.1
$region0: #{tpu_custom_call.1}
  #allocation0 [shape = 'u32[]', space=smem, size = 0x4, offset = 0x4, fixed_abs, tag = 'smem constant byte address 0x4 - core index']
  #allocation1 [shape = 'u32[144,128]{1,0:T(1,128)}', space=vmem, size = 0x12000, scoped, tag = 'internal scratch']
  #allocation2 [shape = 'f32[2,8,32]{2,1,0:T(8,128)}', space=vmem, size = 0x2000, scoped, tag = 'scratch operand']
  #allocation3 [shape = 'f32[64,32]{1,0:T(8,128)}', space=vmem, size = 0x8000, scoped, tag = 'scratch operand']
  #allocation4 [shape = 'f32[64,32]{1,0:T(8,128)}', space=vmem, size = 0x8000, scoped, tag = 'scratch operand']
  %s0 = inlined_call_operand.vmem [shape: f32[128,16], index: 0, kind: input, shape index: {}]
  %s1 = inlined_call_operand.vmem [shape: f32[16,32], index: 1, kind: input, shape index: {}]
  %s2 = inlined_call_operand.vmem [shape: f32[32,32], index: 2, kind: input, shape index: {}]
  %s3 = inlined_call_operand.vmem [shape: f32[32,32], index: 3, kind: input, shape index: {}]
  %s4 = inlined_call_operand.vmem [shape: f32[32,32], index: 4, kind: input, shape index: {}]
  %s5 = inlined_call_operand.vmem [shape: f32[1,32], index: 5, kind: input, shape index: {}]
  %s6 = inlined_call_operand.vmem [shape: f32[1,32], index: 6, kind: input, shape index: {}]
  %s7 = inlined_call_operand.vmem [shape: f32[32,128], index: 7, kind: input, shape index: {}]
  %s8 = inlined_call_operand.vmem [shape: f32[1,128], index: 8, kind: input, shape index: {}]
  %s9 = inlined_call_operand.hbm [shape: f32[8,128], index: 9, kind: output, shape index: {}]
  %s10 = sld [smem:[#allocation0]]
  $region77: #{tpu_custom_call.1} parent=0
    _
  %s12 = ssub.s32 1, %s10
  %s13 = scalar_select 0, %s12, %s10
  $region1: #{tpu_custom_call.1} parent=0
    #allocation5 [shape = 'u8[4096]{0}', space=vmem, size = 0x1000, scoped, tag = 'output window, operand 0, single buffered']
    #allocation6 [shape = 's32[2]{0}', space=sflag, size = 0x8, scoped, tag = 'scoped memory for tpu_custom_call.1']
    %14 = vsyncpa [#allocation6], 0
    loop: start=0, step=1, limit=4
    $region2: #{tpu_custom_call.1} parent=1 // loop_pre_header
      _
    $region3: #{tpu_custom_call.1} parent=1 // loop_header
      %s16 = sphi 0, %s20
      %p17 = scmp.ge.s32.totalorder %s16, 4
      %s26 = sphi 0, %s28
      %s29 = sphi 0, %s26
      %s30 = sphi 0, %s29
      %s46 = sphi 0, %s30
      %s50 = sphi 0, %s50
      %s52 = sphi 0, %s50
      %s53 = sphi 0, %s52
      %s67 = sphi 0, %s53
      %s71 = sphi 0, %s71
      %s73 = sphi 0, %s71
      %s74 = sphi 0, %s73
      %s88 = sphi 0, %s74
      %s92 = sphi 0, %s92
      %s94 = sphi 0, %s92
      %s95 = sphi 0, %s94
      %s109 = sphi 0, %s95
      %s113 = sphi 0, %s113
      %s115 = sphi 0, %s113
      %s116 = sphi 0, %s115
      %s130 = sphi 0, %s116
      %s134 = sphi 0, %s134
      %s136 = sphi 0, %s134
      %s137 = sphi 0, %s136
      %s151 = sphi 0, %s137
      %s155 = sphi 0, %s155
      %s157 = sphi 0, %s155
      %s158 = sphi 0, %s157
      %s172 = sphi 0, %s158
      %s176 = sphi 0, %s176
      %s178 = sphi 0, %s176
      %s179 = sphi 0, %s178
      %s193 = sphi 0, %s179
      %s197 = sphi 0, %s197
      %s199 = sphi 0, %s197
      %s200 = sphi 0, %s199
      %s214 = sphi 0, %s200
      %s218 = sphi 0, %s218
      %s220 = sphi 0, %s218
      %s221 = sphi 0, %s220
      %s235 = sphi 0, %s221
    $region4: #{tpu_custom_call.1} parent=1 // loop_header_branch
      %19 = sbr.rel (%p17) target = $region8
    $region5: #{tpu_custom_call.1} parent=1 // loop_body
      %s21 = ssub.s32 %s16, 1
      %s22 = ssub.s32 %s16, 2
      %s23 = sadd.s32 %s16, 1
      %s24 = ssub.s32 %s16, %s23
      %p25 = scmp.eq.s32.totalorder %s24, 0
      %s27 = sadd.s32 %s26, 1
      %s28 = scalar_select %p25, %s26, %s27
      %p31 = pneg %p25
      %p32 = scmp.eq.s32.totalorder %s16, 1
      %p33 = por %p31, %p32
      %p34 = scmp.ne.s32.totalorder %s26, %s29
      %p35 = scmp.eq.s32.totalorder %s16, 0
      %p36 = por %p34, %p35
      %p37 = scmp.ne.s32.totalorder %s26, %s29
      %p38 = scmp.eq.s32.totalorder %s21, 1
      %p39 = por %p37, %p38
      %p40 = scmp.ne.s32.totalorder %s29, %s30
      %p41 = scmp.eq.s32.totalorder %s21, 0
      %p42 = por %p40, %p41
      %p43 = scmp.ne.s32.totalorder %s29, %s30
      %p44 = scmp.eq.s32.totalorder %s22, 1
      %p45 = por %p43, %p44
      %p47 = scmp.ne.s32.totalorder %s30, %s46
      %p48 = scmp.eq.s32.totalorder %s22, 0
      %p49 = por %p47, %p48
      %s51 = sadd.s32 %s50, 1
      %p54 = scmp.eq.s32.totalorder %s16, 1
      %p55 = scmp.ne.s32.totalorder %s50, %s52
      %p56 = scmp.eq.s32.totalorder %s16, 0
      %p57 = por %p55, %p56
      %p58 = scmp.ne.s32.totalorder %s50, %s52
      %p59 = scmp.eq.s32.totalorder %s21, 1
      %p60 = por %p58, %p59
      %p61 = scmp.ne.s32.totalorder %s52, %s53
      %p62 = scmp.eq.s32.totalorder %s21, 0
      %p63 = por %p61, %p62
      %p64 = scmp.ne.s32.totalorder %s52, %s53
      %p65 = scmp.eq.s32.totalorder %s22, 1
      %p66 = por %p64, %p65
      %p68 = scmp.ne.s32.totalorder %s53, %s67
      %p69 = scmp.eq.s32.totalorder %s22, 0
      %p70 = por %p68, %p69
      %s72 = sadd.s32 %s71, 1
      %p75 = scmp.eq.s32.totalorder %s16, 1
      %p76 = scmp.ne.s32.totalorder %s71, %s73
      %p77 = scmp.eq.s32.totalorder %s16, 0
      %p78 = por %p76, %p77
      %p79 = scmp.ne.s32.totalorder %s71, %s73
      %p80 = scmp.eq.s32.totalorder %s21, 1
      %p81 = por %p79, %p80
      %p82 = scmp.ne.s32.totalorder %s73, %s74
      %p83 = scmp.eq.s32.totalorder %s21, 0
      %p84 = por %p82, %p83
      %p85 = scmp.ne.s32.totalorder %s73, %s74
      %p86 = scmp.eq.s32.totalorder %s22, 1
      %p87 = por %p85, %p86
      %p89 = scmp.ne.s32.totalorder %s74, %s88
      %p90 = scmp.eq.s32.totalorder %s22, 0
      %p91 = por %p89, %p90
      %s93 = sadd.s32 %s92, 1
      %p96 = scmp.eq.s32.totalorder %s16, 1
      %p97 = scmp.ne.s32.totalorder %s92, %s94
      %p98 = scmp.eq.s32.totalorder %s16, 0
      %p99 = por %p97, %p98
      %p100 = scmp.ne.s32.totalorder %s92, %s94
      %p101 = scmp.eq.s32.totalorder %s21, 1
      %p102 = por %p100, %p101
      %p103 = scmp.ne.s32.totalorder %s94, %s95
      %p104 = scmp.eq.s32.totalorder %s21, 0
      %p105 = por %p103, %p104
      %p106 = scmp.ne.s32.totalorder %s94, %s95
      %p107 = scmp.eq.s32.totalorder %s22, 1
      %p108 = por %p106, %p107
      %p110 = scmp.ne.s32.totalorder %s95, %s109
      %p111 = scmp.eq.s32.totalorder %s22, 0
      %p112 = por %p110, %p111
      %s114 = sadd.s32 %s113, 1
      %p117 = scmp.eq.s32.totalorder %s16, 1
      %p118 = scmp.ne.s32.totalorder %s113, %s115
      %p119 = scmp.eq.s32.totalorder %s16, 0
      %p120 = por %p118, %p119
      %p121 = scmp.ne.s32.totalorder %s113, %s115
      %p122 = scmp.eq.s32.totalorder %s21, 1
      %p123 = por %p121, %p122
      %p124 = scmp.ne.s32.totalorder %s115, %s116
      %p125 = scmp.eq.s32.totalorder %s21, 0
      %p126 = por %p124, %p125
      %p127 = scmp.ne.s32.totalorder %s115, %s116
      %p128 = scmp.eq.s32.totalorder %s22, 1
      %p129 = por %p127, %p128
      %p131 = scmp.ne.s32.totalorder %s116, %s130
      %p132 = scmp.eq.s32.totalorder %s22, 0
      %p133 = por %p131, %p132
      %s135 = sadd.s32 %s134, 1
      %p138 = scmp.eq.s32.totalorder %s16, 1
      %p139 = scmp.ne.s32.totalorder %s134, %s136
      %p140 = scmp.eq.s32.totalorder %s16, 0
      %p141 = por %p139, %p140
      %p142 = scmp.ne.s32.totalorder %s134, %s136
      %p143 = scmp.eq.s32.totalorder %s21, 1
      %p144 = por %p142, %p143
      %p145 = scmp.ne.s32.totalorder %s136, %s137
      %p146 = scmp.eq.s32.totalorder %s21, 0
      %p147 = por %p145, %p146
      %p148 = scmp.ne.s32.totalorder %s136, %s137
      %p149 = scmp.eq.s32.totalorder %s22, 1
      %p150 = por %p148, %p149
      %p152 = scmp.ne.s32.totalorder %s137, %s151
      %p153 = scmp.eq.s32.totalorder %s22, 0
      %p154 = por %p152, %p153
      %s156 = sadd.s32 %s155, 1
      %p159 = scmp.eq.s32.totalorder %s16, 1
      %p160 = scmp.ne.s32.totalorder %s155, %s157
      %p161 = scmp.eq.s32.totalorder %s16, 0
      %p162 = por %p160, %p161
      %p163 = scmp.ne.s32.totalorder %s155, %s157
      %p164 = scmp.eq.s32.totalorder %s21, 1
      %p165 = por %p163, %p164
      %p166 = scmp.ne.s32.totalorder %s157, %s158
      %p167 = scmp.eq.s32.totalorder %s21, 0
      %p168 = por %p166, %p167
      %p169 = scmp.ne.s32.totalorder %s157, %s158
      %p170 = scmp.eq.s32.totalorder %s22, 1
      %p171 = por %p169, %p170
      %p173 = scmp.ne.s32.totalorder %s158, %s172
      %p174 = scmp.eq.s32.totalorder %s22, 0
      %p175 = por %p173, %p174
      %s177 = sadd.s32 %s176, 1
      %p180 = scmp.eq.s32.totalorder %s16, 1
      %p181 = scmp.ne.s32.totalorder %s176, %s178
      %p182 = scmp.eq.s32.totalorder %s16, 0
      %p183 = por %p181, %p182
      %p184 = scmp.ne.s32.totalorder %s176, %s178
      %p185 = scmp.eq.s32.totalorder %s21, 1
      %p186 = por %p184, %p185
      %p187 = scmp.ne.s32.totalorder %s178, %s179
      %p188 = scmp.eq.s32.totalorder %s21, 0
      %p189 = por %p187, %p188
      %p190 = scmp.ne.s32.totalorder %s178, %s179
      %p191 = scmp.eq.s32.totalorder %s22, 1
      %p192 = por %p190, %p191
      %p194 = scmp.ne.s32.totalorder %s179, %s193
      %p195 = scmp.eq.s32.totalorder %s22, 0
      %p196 = por %p194, %p195
      %s198 = sadd.s32 %s197, 1
      %p201 = scmp.eq.s32.totalorder %s16, 1
      %p202 = scmp.ne.s32.totalorder %s197, %s199
      %p203 = scmp.eq.s32.totalorder %s16, 0
      %p204 = por %p202, %p203
      %p205 = scmp.ne.s32.totalorder %s197, %s199
      %p206 = scmp.eq.s32.totalorder %s21, 1
      %p207 = por %p205, %p206
      %p208 = scmp.ne.s32.totalorder %s199, %s200
      %p209 = scmp.eq.s32.totalorder %s21, 0
      %p210 = por %p208, %p209
      %p211 = scmp.ne.s32.totalorder %s199, %s200
      %p212 = scmp.eq.s32.totalorder %s22, 1
      %p213 = por %p211, %p212
      %p215 = scmp.ne.s32.totalorder %s200, %s214
      %p216 = scmp.eq.s32.totalorder %s22, 0
      %p217 = por %p215, %p216
      %s219 = sadd.s32 %s218, 1
      %p222 = scmp.eq.s32.totalorder %s16, 1
      %p223 = scmp.ne.s32.totalorder %s218, %s220
      %p224 = scmp.eq.s32.totalorder %s16, 0
      %p225 = por %p223, %p224
      %p226 = scmp.ne.s32.totalorder %s218, %s220
      %p227 = scmp.eq.s32.totalorder %s21, 1
      %p228 = por %p226, %p227
      %p229 = scmp.ne.s32.totalorder %s220, %s221
      %p230 = scmp.eq.s32.totalorder %s21, 0
      %p231 = por %p229, %p230
      %p232 = scmp.ne.s32.totalorder %s220, %s221
      %p233 = scmp.eq.s32.totalorder %s22, 1
      %p234 = por %p232, %p233
      %p236 = scmp.ne.s32.totalorder %s221, %s235
      %p237 = scmp.eq.s32.totalorder %s22, 0
      %p238 = por %p236, %p237
      %p239 = scmp.le.s32.totalorder 1, %s16
      %p240 = scmp.lt.s32.totalorder %s16, 3
      %p241 = pnand %p239, %p240
      %p242 = pneg %p241
      // Predicated region
      $region9: #{tpu_custom_call.1} parent=5 // pred_check
        _
      $region10: #{tpu_custom_call.1} parent=5 // pred_check_branch
        %244 = sbr.rel (%p241) target = $region12
      $region11: #{tpu_custom_call.1} parent=5 // pred_region
        %s245 = ssub.s32 %s16, 1
        // Predicated region
        $region13: #{tpu_custom_call.1} parent=11 // pred_check
          %p246 = pneg %p63
        $region14: #{tpu_custom_call.1} parent=11 // pred_check_branch
          %248 = sbr.rel (%p246) target = $region16
        $region15: #{tpu_custom_call.1} parent=11 // pred_region
          _
        $region16: #{tpu_custom_call.1} parent=11 // pred_fallthru
          _
        // Predicated region
        $region17: #{tpu_custom_call.1} parent=11 // pred_check
          %p249 = pneg %p84
        $region18: #{tpu_custom_call.1} parent=11 // pred_check_branch
          %251 = sbr.rel (%p249) target = $region20
        $region19: #{tpu_custom_call.1} parent=11 // pred_region
          _
        $region20: #{tpu_custom_call.1} parent=11 // pred_fallthru
          _
        // Predicated region
        $region21: #{tpu_custom_call.1} parent=11 // pred_check
          %p252 = pneg %p105
        $region22: #{tpu_custom_call.1} parent=11 // pred_check_branch
          %254 = sbr.rel (%p252) target = $region24
        $region23: #{tpu_custom_call.1} parent=11 // pred_region
          _
        $region24: #{tpu_custom_call.1} parent=11 // pred_fallthru
          _
        // Predicated region
        $region25: #{tpu_custom_call.1} parent=11 // pred_check
          %p255 = pneg %p126
        $region26: #{tpu_custom_call.1} parent=11 // pred_check_branch
          %257 = sbr.rel (%p255) target = $region28
        $region27: #{tpu_custom_call.1} parent=11 // pred_region
          _
        $region28: #{tpu_custom_call.1} parent=11 // pred_fallthru
          _
        // Predicated region
        $region29: #{tpu_custom_call.1} parent=11 // pred_check
          %p258 = pneg %p147
        $region30: #{tpu_custom_call.1} parent=11 // pred_check_branch
          %260 = sbr.rel (%p258) target = $region32
        $region31: #{tpu_custom_call.1} parent=11 // pred_region
          _
        $region32: #{tpu_custom_call.1} parent=11 // pred_fallthru
          _
        // Predicated region
        $region33: #{tpu_custom_call.1} parent=11 // pred_check
          %p261 = pneg %p168
        $region34: #{tpu_custom_call.1} parent=11 // pred_check_branch
          %263 = sbr.rel (%p261) target = $region36
        $region35: #{tpu_custom_call.1} parent=11 // pred_region
          _
        $region36: #{tpu_custom_call.1} parent=11 // pred_fallthru
          _
        // Predicated region
        $region37: #{tpu_custom_call.1} parent=11 // pred_check
          %p264 = pneg %p189
        $region38: #{tpu_custom_call.1} parent=11 // pred_check_branch
          %266 = sbr.rel (%p264) target = $region40
        $region39: #{tpu_custom_call.1} parent=11 // pred_region
          _
        $region40: #{tpu_custom_call.1} parent=11 // pred_fallthru
          _
        // Predicated region
        $region41: #{tpu_custom_call.1} parent=11 // pred_check
          %p267 = pneg %p210
        $region42: #{tpu_custom_call.1} parent=11 // pred_check_branch
          %269 = sbr.rel (%p267) target = $region44
        $region43: #{tpu_custom_call.1} parent=11 // pred_region
          _
        $region44: #{tpu_custom_call.1} parent=11 // pred_fallthru
          _
      $region12: #{tpu_custom_call.1} parent=5 // pred_fallthru
        _
      %p270 = scmp.lt.s32.totalorder %s16, 2
      // Predicated region
      $region45: #{tpu_custom_call.1} parent=5 // pred_check
        %p271 = pneg %p270
      $region46: #{tpu_custom_call.1} parent=5 // pred_check_branch
        %273 = sbr.rel (%p271) target = $region48
      $region47: #{tpu_custom_call.1} parent=5 // pred_region
        // Predicated region
        $region49: #{tpu_custom_call.1} parent=47 // pred_check
          %p274 = pneg %p36
        $region50: #{tpu_custom_call.1} parent=47 // pred_check_branch
          %276 = sbr.rel (%p274) target = $region52
        $region51: #{tpu_custom_call.1} parent=47 // pred_region
          %s277 = smul.u32 8, %s16
          %p278 = scmp.lt.s32.totalorder %s277, 15
          %s279 = scalar_select %p278, %s277, 15
          %s280 = smul.addr %s279, 8
          %s281 = scalar_lea.vmem %s0, %s280
          %s282 = smul.u32 8, %s16
        $region52: #{tpu_custom_call.1} parent=47 // pred_fallthru
          _
      $region48: #{tpu_custom_call.1} parent=5 // pred_fallthru
        _
      %p283 = scmp.le.s32.totalorder 1, %s16
      %p284 = scmp.lt.s32.totalorder %s16, 3
      %p285 = pnand %p283, %p284
      %p286 = pneg %p285
      // Predicated region
      $region53: #{tpu_custom_call.1} parent=5 // pred_check
        _
      $region54: #{tpu_custom_call.1} parent=5 // pred_check_branch
        %288 = sbr.rel (%p285) target = $region56
      $region55: #{tpu_custom_call.1} parent=5 // pred_region
        %s289 = ssub.s32 %s16, 1
        %s290 = smul.u32 8, %s21
        %p291 = scmp.lt.s32.totalorder %s290, 15
        %s292 = scalar_select %p291, %s290, 15
        %s293 = smul.addr %s292, 8
        %s294 = scalar_lea.vmem %s0, %s293
        %p295 = pneg %p42
        %p296 = pneg %p39
        %p297 = pneg %p63
        %p298 = pneg %p60
        %p299 = pneg %p84
        %p300 = pneg %p81
        %p301 = pneg %p105
        %p302 = pneg %p102
        %p303 = pneg %p126
        %p304 = pneg %p123
        %p305 = pneg %p147
        %p306 = pneg %p144
        %p307 = pneg %p168
        %p308 = pneg %p165
        %p309 = pneg %p189
        %p310 = pneg %p186
        %p311 = pneg %p210
        %p312 = pneg %p207
        %p313 = pneg %p231
        %p314 = pneg %p228
        %s315 = smul.u32 8, %s21
        %p316 = scmp.lt.s32.totalorder %s315, 15
        %s317 = scalar_select %p316, %s315, 15
        %s318 = smul.addr %s317, 8
        %s319 = scalar_lea.vmem %s0, %s318
        %s320 = smul.u32 8, %s21
        %p321 = scmp.eq.s32.totalorder %s21, 0
        // Predicated region
        $region57: #{tpu_custom_call.1} parent=55 // pred_check
          %p322 = pneg %p321
        $region58: #{tpu_custom_call.1} parent=55 // pred_check_branch
          %324 = sbr.rel (%p322) target = $region60
        $region59: #{tpu_custom_call.1} parent=55 // pred_region
          %vm325 = vcmask 261120
          %326 = vst.msk [vmem:[#allocation2] sm:$0xff] %vm325, 0.0
          %327 = vst.msk [vmem:[#allocation2 + $0x8] sm:$0xff] %vm325, 0.0
        $region60: #{tpu_custom_call.1} parent=55 // pred_fallthru
          _
        %v328 = vld [vmem:[%s319] sm:$0xff]
        %v329 = vld [vmem:[%s319 + $0x8] sm:$0xff]
        %v330 = vld [vmem:[%s319 + $0x10] sm:$0xff]
        %v331 = vld [vmem:[%s319 + $0x18] sm:$0xff]
        %v332 = vld [vmem:[%s319 + $0x20] sm:$0xff]
        %v333 = vld [vmem:[%s319 + $0x28] sm:$0xff]
        %v334 = vld [vmem:[%s319 + $0x30] sm:$0xff]
        %v335 = vld [vmem:[%s319 + $0x38] sm:$0xff]
        %v336 = vld [vmem:[%s1] sm:$0xff]
        %v337 = vld [vmem:[%s1 + $0x8] sm:$0xff]
        %v338 = vld [vmem:[%s5] sm:$0x1]
        %v340 = vlaneseq
        %v341 = vshrl.u32 %v340, 7
        %v342 = vsub.s32 0, %v341
        %v343 = vrot.slane %v338, %v342
        %vm345 = vcmask 130048
        %v347 = vsel %vm345, %v328, 0
        %v350 = vsel %vm345, %v329, 0
        %v353 = vsel %vm345, %v330, 0
        %v356 = vsel %vm345, %v331, 0
        %v359 = vsel %vm345, %v332, 0
        %v362 = vsel %vm345, %v333, 0
        %v365 = vsel %vm345, %v334, 0
        %v368 = vsel %vm345, %v335, 0
        %370 = vmatprep.subr.mxu0 0.0
        %371 = vmatpush1.msra.mxu0 0.0
        %372 = vmatprep.subr.mxu0 0.0
        %373 = vmatpush1.msra.mxu0 0.0
        %374 = vmatprep.subr.mxu0 0.0
        %375 = vmatpush1.msra.mxu0 0.0
        %376 = vmatprep.subr.mxu0 0.0
        %377 = vmatpush1.msra.mxu0 0.0
        %378 = vmatprep.subr.mxu0 0.0
        %379 = vmatpush1.msra.mxu0 0.0
        %380 = vmatprep.subr.mxu0 0.0
        %381 = vmatpush1.msra.mxu0 0.0
        %382 = vmatprep.subr.mxu0 0.0
        %383 = vmatpush1.msra.mxu0 0.0
        %384 = vmatprep.subr.mxu0 0.0
        %385 = vmatpush1.msra.mxu0 0.0
        %386 = vmatprep.subr.mxu0 0.0
        %387 = vmatpush1.msra.mxu0 0.0
        %388 = vmatprep.subr.mxu0 0.0
        %389 = vmatpush1.msra.mxu0 0.0
        %390 = vmatprep.subr.mxu0 0.0
        %391 = vmatpush1.msra.mxu0 0.0
        %392 = vmatprep.subr.mxu0 0.0
        %393 = vmatpush1.msra.mxu0 0.0
        %394 = vmatprep.subr.mxu0 0.0
        %395 = vmatpush1.msra.mxu0 0.0
        %396 = vmatprep.subr.mxu0 0.0
        %397 = vmatpush1.msra.mxu0 0.0
        %398 = vmatprep.subr.mxu0 0.0
        %399 = vmatpush1.msra.mxu0 %v337
        %400 = vmatprep.subr.mxu0 0.0
        %401 = vmatpush1.msra.mxu0 %v336
        %402 = vmatprep.subr.mxu0 0.0
        %403 = vmatpush2.msra.mxu0 0.0
        %404 = vmatprep.subr.mxu0 0.0
        %405 = vmatpush2.msra.mxu0 0.0
        %406 = vmatprep.subr.mxu0 0.0
        %407 = vmatpush2.msra.mxu0 0.0
        %408 = vmatprep.subr.mxu0 0.0
        %409 = vmatpush2.msra.mxu0 0.0
        %410 = vmatprep.subr.mxu0 0.0
        %411 = vmatpush2.msra.mxu0 0.0
        %412 = vmatprep.subr.mxu0 0.0
        %413 = vmatpush2.msra.mxu0 0.0
        %414 = vmatprep.subr.mxu0 0.0
        %415 = vmatpush2.msra.mxu0 0.0
        %416 = vmatprep.subr.mxu0 0.0
        %417 = vmatpush2.msra.mxu0 0.0
        %418 = vmatprep.subr.mxu0 0.0
        %419 = vmatpush2.msra.mxu0 0.0
        %420 = vmatprep.subr.mxu0 0.0
        %421 = vmatpush2.msra.mxu0 0.0
        %422 = vmatprep.subr.mxu0 0.0
        %423 = vmatpush2.msra.mxu0 0.0
        %424 = vmatprep.subr.mxu0 0.0
        %425 = vmatpush2.msra.mxu0 0.0
        %426 = vmatprep.subr.mxu0 0.0
        %427 = vmatpush2.msra.mxu0 0.0
        %428 = vmatprep.subr.mxu0 0.0
        %429 = vmatpush2.msra.mxu0 0.0
        %430 = vmatprep.subr.mxu0 0.0
        %431 = vmatpush2.msra.mxu0 0.0
        %432 = vmatprep.subr.mxu0 0.0
        %433 = vmatpush2.msra.mxu0 0.0
        %434 = vmatprep.mubr.f32.mxu0 0.0
        %435 = vmatmul.mubr.f32.gmra.mxu0 %v347
        %v436 = vpop.f32.mrf.mxu0
        %v437 = vadd.f32 %v343, %v436
        %v438 = vpop.f32.mrf.mxu0
        %439 = vmatprep.mubr.f32.mxu0 0.0
        %440 = vmatmul.mubr.f32.gmra.mxu0 %v350
        %v441 = vpop.f32.mrf.mxu0
        %v442 = vadd.f32 %v343, %v441
        %v443 = vpop.f32.mrf.mxu0
        %444 = vmatprep.mubr.f32.mxu0 0.0
        %445 = vmatmul.mubr.f32.gmra.mxu0 %v353
        %v446 = vpop.f32.mrf.mxu0
        %v447 = vadd.f32 %v343, %v446
        %v448 = vpop.f32.mrf.mxu0
        %449 = vmatprep.mubr.f32.mxu0 0.0
        %450 = vmatmul.mubr.f32.gmra.mxu0 %v356
        %v451 = vpop.f32.mrf.mxu0
        %v452 = vadd.f32 %v343, %v451
        %v453 = vpop.f32.mrf.mxu0
        %454 = vmatprep.mubr.f32.mxu0 0.0
        %455 = vmatmul.mubr.f32.gmra.mxu0 %v359
        %v456 = vpop.f32.mrf.mxu0
        %v457 = vadd.f32 %v343, %v456
        %v458 = vpop.f32.mrf.mxu0
        %459 = vmatprep.mubr.f32.mxu0 0.0
        %460 = vmatmul.mubr.f32.gmra.mxu0 %v362
        %v461 = vpop.f32.mrf.mxu0
        %v462 = vadd.f32 %v343, %v461
        %v463 = vpop.f32.mrf.mxu0
        %464 = vmatprep.mubr.f32.mxu0 0.0
        %465 = vmatmul.mubr.f32.gmra.mxu0 %v365
        %v466 = vpop.f32.mrf.mxu0
        %v467 = vadd.f32 %v343, %v466
        %v468 = vpop.f32.mrf.mxu0
        %469 = vmatprep.mubr.f32.mxu0 0.0
        %470 = vmatmul.mubr.f32.gmra.mxu0 %v368
        %v471 = vpop.f32.mrf.mxu0
        %v472 = vadd.f32 %v343, %v471
        %v473 = vpop.f32.mrf.mxu0
        %474 = vdwg.mxu0
        %vm475 = vcmask 261120
        %476 = vst.msk [vmem:[#allocation3] sm:$0xff] %vm475, %v437
        %477 = vst.msk [vmem:[#allocation3 + $0x8] sm:$0xff] %vm475, %v442
        %478 = vst.msk [vmem:[#allocation3 + $0x10] sm:$0xff] %vm475, %v447
        %479 = vst.msk [vmem:[#allocation3 + $0x18] sm:$0xff] %vm475, %v452
        %480 = vst.msk [vmem:[#allocation3 + $0x20] sm:$0xff] %vm475, %v457
        %481 = vst.msk [vmem:[#allocation3 + $0x28] sm:$0xff] %vm475, %v462
        %482 = vst.msk [vmem:[#allocation3 + $0x30] sm:$0xff] %vm475, %v467
        %483 = vst.msk [vmem:[#allocation3 + $0x38] sm:$0xff] %vm475, %v472
        %v484 = vld [vmem:[%s3] sm:$0xff]
        %v485 = vld [vmem:[%s3 + $0x8] sm:$0xff]
        %v486 = vld [vmem:[%s3 + $0x10] sm:$0xff]
        %v487 = vld [vmem:[%s3 + $0x18] sm:$0xff]
        %v488 = vld [vmem:[#allocation2] sm:$0xff]
        %v489 = vld [vmem:[#allocation3] sm:$0xff]
        %v491 = vsel %vm475, %v488, 0
        %493 = vmatprep.subr.mxu0 0.0
        %494 = vmatpush1.msra.mxu0 0.0
        %495 = vmatprep.subr.mxu0 0.0
        %496 = vmatpush1.msra.mxu0 0.0
        %497 = vmatprep.subr.mxu0 0.0
        %498 = vmatpush1.msra.mxu0 0.0
        %499 = vmatprep.subr.mxu0 0.0
        %500 = vmatpush1.msra.mxu0 0.0
        %501 = vmatprep.subr.mxu0 0.0
        %502 = vmatpush1.msra.mxu0 0.0
        %503 = vmatprep.subr.mxu0 0.0
        %504 = vmatpush1.msra.mxu0 0.0
        %505 = vmatprep.subr.mxu0 0.0
        %506 = vmatpush1.msra.mxu0 0.0
        %507 = vmatprep.subr.mxu0 0.0
        %508 = vmatpush1.msra.mxu0 0.0
        %509 = vmatprep.subr.mxu0 0.0
        %510 = vmatpush1.msra.mxu0 0.0
        %511 = vmatprep.subr.mxu0 0.0
        %512 = vmatpush1.msra.mxu0 0.0
        %513 = vmatprep.subr.mxu0 0.0
        %514 = vmatpush1.msra.mxu0 0.0
        %515 = vmatprep.subr.mxu0 0.0
        %516 = vmatpush1.msra.mxu0 0.0
        %517 = vmatprep.subr.mxu0 0.0
        %518 = vmatpush1.msra.mxu0 %v487
        %519 = vmatprep.subr.mxu0 0.0
        %520 = vmatpush1.msra.mxu0 %v486
        %521 = vmatprep.subr.mxu0 0.0
        %522 = vmatpush1.msra.mxu0 %v485
        %523 = vmatprep.subr.mxu0 0.0
        %524 = vmatpush1.msra.mxu0 %v484
        %525 = vmatprep.subr.mxu0 0.0
        %526 = vmatpush2.msra.mxu0 0.0
        %527 = vmatprep.subr.mxu0 0.0
        %528 = vmatpush2.msra.mxu0 0.0
        %529 = vmatprep.subr.mxu0 0.0
        %530 = vmatpush2.msra.mxu0 0.0
        %531 = vmatprep.subr.mxu0 0.0
        %532 = vmatpush2.msra.mxu0 0.0
        %533 = vmatprep.subr.mxu0 0.0
        %534 = vmatpush2.msra.mxu0 0.0
        %535 = vmatprep.subr.mxu0 0.0
        %536 = vmatpush2.msra.mxu0 0.0
        %537 = vmatprep.subr.mxu0 0.0
        %538 = vmatpush2.msra.mxu0 0.0
        %539 = vmatprep.subr.mxu0 0.0
        %540 = vmatpush2.msra.mxu0 0.0
        %541 = vmatprep.subr.mxu0 0.0
        %542 = vmatpush2.msra.mxu0 0.0
        %543 = vmatprep.subr.mxu0 0.0
        %544 = vmatpush2.msra.mxu0 0.0
        %545 = vmatprep.subr.mxu0 0.0
        %546 = vmatpush2.msra.mxu0 0.0
        %547 = vmatprep.subr.mxu0 0.0
        %548 = vmatpush2.msra.mxu0 0.0
        %549 = vmatprep.subr.mxu0 0.0
        %550 = vmatpush2.msra.mxu0 0.0
        %551 = vmatprep.subr.mxu0 0.0
        %552 = vmatpush2.msra.mxu0 0.0
        %553 = vmatprep.subr.mxu0 0.0
        %554 = vmatpush2.msra.mxu0 0.0
        %555 = vmatprep.subr.mxu0 0.0
        %556 = vmatpush2.msra.mxu0 0.0
        %557 = vmatprep.mubr.f32.mxu0 0.0
        %558 = vmatmul.mubr.f32.gmra.mxu0 %v491
        %v559 = vpop.f32.mrf.mxu0
        %v560 = vadd.f32 0.0, %v559
        %v561 = vpop.f32.mrf.mxu0
        %562 = vdwg.mxu0
        %v563 = vadd.f32 %v489, %v560
        %v564 = vtanh.pop %v563
        %565 = vst.msk [vmem:[#allocation4] sm:$0xff] %vm475, %v564
        %v566 = vld [vmem:[#allocation3 + $0x8] sm:$0xff]
        %v568 = vsel %vm475, %v564, 0
        %570 = vmatprep.subr.mxu0 0.0
        %571 = vmatpush1.msra.mxu0 0.0
        %572 = vmatprep.subr.mxu0 0.0
        %573 = vmatpush1.msra.mxu0 0.0
        %574 = vmatprep.subr.mxu0 0.0
        %575 = vmatpush1.msra.mxu0 0.0
        %576 = vmatprep.subr.mxu0 0.0
        %577 = vmatpush1.msra.mxu0 0.0
        %578 = vmatprep.subr.mxu0 0.0
        %579 = vmatpush1.msra.mxu0 0.0
        %580 = vmatprep.subr.mxu0 0.0
        %581 = vmatpush1.msra.mxu0 0.0
        %582 = vmatprep.subr.mxu0 0.0
        %583 = vmatpush1.msra.mxu0 0.0
        %584 = vmatprep.subr.mxu0 0.0
        %585 = vmatpush1.msra.mxu0 0.0
        %586 = vmatprep.subr.mxu0 0.0
        %587 = vmatpush1.msra.mxu0 0.0
        %588 = vmatprep.subr.mxu0 0.0
        %589 = vmatpush1.msra.mxu0 0.0
        %590 = vmatprep.subr.mxu0 0.0
        %591 = vmatpush1.msra.mxu0 0.0
        %592 = vmatprep.subr.mxu0 0.0
        %593 = vmatpush1.msra.mxu0 0.0
        %594 = vmatprep.subr.mxu0 0.0
        %595 = vmatpush1.msra.mxu0 %v487
        %596 = vmatprep.subr.mxu0 0.0
        %597 = vmatpush1.msra.mxu0 %v486
        %598 = vmatprep.subr.mxu0 0.0
        %599 = vmatpush1.msra.mxu0 %v485
        %600 = vmatprep.subr.mxu0 0.0
        %601 = vmatpush1.msra.mxu0 %v484
        %602 = vmatprep.subr.mxu0 0.0
        %603 = vmatpush2.msra.mxu0 0.0
        %604 = vmatprep.subr.mxu0 0.0
        %605 = vmatpush2.msra.mxu0 0.0
        %606 = vmatprep.subr.mxu0 0.0
        %607 = vmatpush2.msra.mxu0 0.0
        %608 = vmatprep.subr.mxu0 0.0
        %609 = vmatpush2.msra.mxu0 0.0
        %610 = vmatprep.subr.mxu0 0.0
        %611 = vmatpush2.msra.mxu0 0.0
        %612 = vmatprep.subr.mxu0 0.0
        %613 = vmatpush2.msra.mxu0 0.0
        %614 = vmatprep.subr.mxu0 0.0
        %615 = vmatpush2.msra.mxu0 0.0
        %616 = vmatprep.subr.mxu0 0.0
        %617 = vmatpush2.msra.mxu0 0.0
        %618 = vmatprep.subr.mxu0 0.0
        %619 = vmatpush2.msra.mxu0 0.0
        %620 = vmatprep.subr.mxu0 0.0
        %621 = vmatpush2.msra.mxu0 0.0
        %622 = vmatprep.subr.mxu0 0.0
        %623 = vmatpush2.msra.mxu0 0.0
        %624 = vmatprep.subr.mxu0 0.0
        %625 = vmatpush2.msra.mxu0 0.0
        %626 = vmatprep.subr.mxu0 0.0
        %627 = vmatpush2.msra.mxu0 0.0
        %628 = vmatprep.subr.mxu0 0.0
        %629 = vmatpush2.msra.mxu0 0.0
        %630 = vmatprep.subr.mxu0 0.0
        %631 = vmatpush2.msra.mxu0 0.0
        %632 = vmatprep.subr.mxu0 0.0
        %633 = vmatpush2.msra.mxu0 0.0
        %634 = vmatprep.mubr.f32.mxu0 0.0
        %635 = vmatmul.mubr.f32.gmra.mxu0 %v568
        %v636 = vpop.f32.mrf.mxu0
        %v637 = vadd.f32 0.0, %v636
        %v638 = vpop.f32.mrf.mxu0
        %639 = vdwg.mxu0
        %v640 = vadd.f32 %v566, %v637
        %v641 = vtanh.pop %v640
        %642 = vst.msk [vmem:[#allocation4 + $0x8] sm:$0xff] %vm475, %v641
        %v643 = vld [vmem:[#allocation3 + $0x10] sm:$0xff]
        %v645 = vsel %vm475, %v641, 0
        %647 = vmatprep.subr.mxu0 0.0
        %648 = vmatpush1.msra.mxu0 0.0
        %649 = vmatprep.subr.mxu0 0.0
        %650 = vmatpush1.msra.mxu0 0.0
        %651 = vmatprep.subr.mxu0 0.0
        %652 = vmatpush1.msra.mxu0 0.0
        %653 = vmatprep.subr.mxu0 0.0
        %654 = vmatpush1.msra.mxu0 0.0
        %655 = vmatprep.subr.mxu0 0.0
        %656 = vmatpush1.msra.mxu0 0.0
        %657 = vmatprep.subr.mxu0 0.0
        %658 = vmatpush1.msra.mxu0 0.0
        %659 = vmatprep.subr.mxu0 0.0
        %660 = vmatpush1.msra.mxu0 0.0
        %661 = vmatprep.subr.mxu0 0.0
        %662 = vmatpush1.msra.mxu0 0.0
        %663 = vmatprep.subr.mxu0 0.0
        %664 = vmatpush1.msra.mxu0 0.0
        %665 = vmatprep.subr.mxu0 0.0
        %666 = vmatpush1.msra.mxu0 0.0
        %667 = vmatprep.subr.mxu0 0.0
        %668 = vmatpush1.msra.mxu0 0.0
        %669 = vmatprep.subr.mxu0 0.0
        %670 = vmatpush1.msra.mxu0 0.0
        %671 = vmatprep.subr.mxu0 0.0
        %672 = vmatpush1.msra.mxu0 %v487
        %673 = vmatprep.subr.mxu0 0.0
        %674 = vmatpush1.msra.mxu0 %v486
        %675 = vmatprep.subr.mxu0 0.0
        %676 = vmatpush1.msra.mxu0 %v485
        %677 = vmatprep.subr.mxu0 0.0
        %678 = vmatpush1.msra.mxu0 %v484
        %679 = vmatprep.subr.mxu0 0.0
        %680 = vmatpush2.msra.mxu0 0.0
        %681 = vmatprep.subr.mxu0 0.0
        %682 = vmatpush2.msra.mxu0 0.0
        %683 = vmatprep.subr.mxu0 0.0
        %684 = vmatpush2.msra.mxu0 0.0
        %685 = vmatprep.subr.mxu0 0.0
        %686 = vmatpush2.msra.mxu0 0.0
        %687 = vmatprep.subr.mxu0 0.0
        %688 = vmatpush2.msra.mxu0 0.0
        %689 = vmatprep.subr.mxu0 0.0
        %690 = vmatpush2.msra.mxu0 0.0
        %691 = vmatprep.subr.mxu0 0.0
        %692 = vmatpush2.msra.mxu0 0.0
        %693 = vmatprep.subr.mxu0 0.0
        %694 = vmatpush2.msra.mxu0 0.0
        %695 = vmatprep.subr.mxu0 0.0
        %696 = vmatpush2.msra.mxu0 0.0
        %697 = vmatprep.subr.mxu0 0.0
        %698 = vmatpush2.msra.mxu0 0.0
        %699 = vmatprep.subr.mxu0 0.0
        %700 = vmatpush2.msra.mxu0 0.0
        %701 = vmatprep.subr.mxu0 0.0
        %702 = vmatpush2.msra.mxu0 0.0
        %703 = vmatprep.subr.mxu0 0.0
        %704 = vmatpush2.msra.mxu0 0.0
        %705 = vmatprep.subr.mxu0 0.0
        %706 = vmatpush2.msra.mxu0 0.0
        %707 = vmatprep.subr.mxu0 0.0
        %708 = vmatpush2.msra.mxu0 0.0
        %709 = vmatprep.subr.mxu0 0.0
        %710 = vmatpush2.msra.mxu0 0.0
        %711 = vmatprep.mubr.f32.mxu0 0.0
        %712 = vmatmul.mubr.f32.gmra.mxu0 %v645
        %v713 = vpop.f32.mrf.mxu0
        %v714 = vadd.f32 0.0, %v713
        %v715 = vpop.f32.mrf.mxu0
        %716 = vdwg.mxu0
        %v717 = vadd.f32 %v643, %v714
        %v718 = vtanh.pop %v717
        %719 = vst.msk [vmem:[#allocation4 + $0x10] sm:$0xff] %vm475, %v718
        %v720 = vld [vmem:[#allocation3 + $0x18] sm:$0xff]
        %v722 = vsel %vm475, %v718, 0
        %724 = vmatprep.subr.mxu0 0.0
        %725 = vmatpush1.msra.mxu0 0.0
        %726 = vmatprep.subr.mxu0 0.0
        %727 = vmatpush1.msra.mxu0 0.0
        %728 = vmatprep.subr.mxu0 0.0
        %729 = vmatpush1.msra.mxu0 0.0
        %730 = vmatprep.subr.mxu0 0.0
        %731 = vmatpush1.msra.mxu0 0.0
        %732 = vmatprep.subr.mxu0 0.0
        %733 = vmatpush1.msra.mxu0 0.0
        %734 = vmatprep.subr.mxu0 0.0
        %735 = vmatpush1.msra.mxu0 0.0
        %736 = vmatprep.subr.mxu0 0.0
        %737 = vmatpush1.msra.mxu0 0.0
        %738 = vmatprep.subr.mxu0 0.0
        %739 = vmatpush1.msra.mxu0 0.0
        %740 = vmatprep.subr.mxu0 0.0
        %741 = vmatpush1.msra.mxu0 0.0
        %742 = vmatprep.subr.mxu0 0.0
        %743 = vmatpush1.msra.mxu0 0.0
        %744 = vmatprep.subr.mxu0 0.0
        %745 = vmatpush1.msra.mxu0 0.0
        %746 = vmatprep.subr.mxu0 0.0
        %747 = vmatpush1.msra.mxu0 0.0
        %748 = vmatprep.subr.mxu0 0.0
        %749 = vmatpush1.msra.mxu0 %v487
        %750 = vmatprep.subr.mxu0 0.0
        %751 = vmatpush1.msra.mxu0 %v486
        %752 = vmatprep.subr.mxu0 0.0
        %753 = vmatpush1.msra.mxu0 %v485
        %754 = vmatprep.subr.mxu0 0.0
        %755 = vmatpush1.msra.mxu0 %v484
        %756 = vmatprep.subr.mxu0 0.0
        %757 = vmatpush2.msra.mxu0 0.0
        %758 = vmatprep.subr.mxu0 0.0
        %759 = vmatpush2.msra.mxu0 0.0
        %760 = vmatprep.subr.mxu0 0.0
        %761 = vmatpush2.msra.mxu0 0.0
        %762 = vmatprep.subr.mxu0 0.0
        %763 = vmatpush2.msra.mxu0 0.0
        %764 = vmatprep.subr.mxu0 0.0
        %765 = vmatpush2.msra.mxu0 0.0
        %766 = vmatprep.subr.mxu0 0.0
        %767 = vmatpush2.msra.mxu0 0.0
        %768 = vmatprep.subr.mxu0 0.0
        %769 = vmatpush2.msra.mxu0 0.0
        %770 = vmatprep.subr.mxu0 0.0
        %771 = vmatpush2.msra.mxu0 0.0
        %772 = vmatprep.subr.mxu0 0.0
        %773 = vmatpush2.msra.mxu0 0.0
        %774 = vmatprep.subr.mxu0 0.0
        %775 = vmatpush2.msra.mxu0 0.0
        %776 = vmatprep.subr.mxu0 0.0
        %777 = vmatpush2.msra.mxu0 0.0
        %778 = vmatprep.subr.mxu0 0.0
        %779 = vmatpush2.msra.mxu0 0.0
        %780 = vmatprep.subr.mxu0 0.0
        %781 = vmatpush2.msra.mxu0 0.0
        %782 = vmatprep.subr.mxu0 0.0
        %783 = vmatpush2.msra.mxu0 0.0
        %784 = vmatprep.subr.mxu0 0.0
        %785 = vmatpush2.msra.mxu0 0.0
        %786 = vmatprep.subr.mxu0 0.0
        %787 = vmatpush2.msra.mxu0 0.0
        %788 = vmatprep.mubr.f32.mxu0 0.0
        %789 = vmatmul.mubr.f32.gmra.mxu0 %v722
        %v790 = vpop.f32.mrf.mxu0
        %v791 = vadd.f32 0.0, %v790
        %v792 = vpop.f32.mrf.mxu0
        %793 = vdwg.mxu0
        %v794 = vadd.f32 %v720, %v791
        %v795 = vtanh.pop %v794
        %796 = vst.msk [vmem:[#allocation4 + $0x18] sm:$0xff] %vm475, %v795
        %v797 = vld [vmem:[#allocation3 + $0x20] sm:$0xff]
        %v799 = vsel %vm475, %v795, 0
        %801 = vmatprep.subr.mxu0 0.0
        %802 = vmatpush1.msra.mxu0 0.0
        %803 = vmatprep.subr.mxu0 0.0
        %804 = vmatpush1.msra.mxu0 0.0
        %805 = vmatprep.subr.mxu0 0.0
        %806 = vmatpush1.msra.mxu0 0.0
        %807 = vmatprep.subr.mxu0 0.0
        %808 = vmatpush1.msra.mxu0 0.0
        %809 = vmatprep.subr.mxu0 0.0
        %810 = vmatpush1.msra.mxu0 0.0
        %811 = vmatprep.subr.mxu0 0.0
        %812 = vmatpush1.msra.mxu0 0.0
        %813 = vmatprep.subr.mxu0 0.0
        %814 = vmatpush1.msra.mxu0 0.0
        %815 = vmatprep.subr.mxu0 0.0
        %816 = vmatpush1.msra.mxu0 0.0
        %817 = vmatprep.subr.mxu0 0.0
        %818 = vmatpush1.msra.mxu0 0.0
        %819 = vmatprep.subr.mxu0 0.0
        %820 = vmatpush1.msra.mxu0 0.0
        %821 = vmatprep.subr.mxu0 0.0
        %822 = vmatpush1.msra.mxu0 0.0
        %823 = vmatprep.subr.mxu0 0.0
        %824 = vmatpush1.msra.mxu0 0.0
        %825 = vmatprep.subr.mxu0 0.0
        %826 = vmatpush1.msra.mxu0 %v487
        %827 = vmatprep.subr.mxu0 0.0
        %828 = vmatpush1.msra.mxu0 %v486
        %829 = vmatprep.subr.mxu0 0.0
        %830 = vmatpush1.msra.mxu0 %v485
        %831 = vmatprep.subr.mxu0 0.0
        %832 = vmatpush1.msra.mxu0 %v484
        %833 = vmatprep.subr.mxu0 0.0
        %834 = vmatpush2.msra.mxu0 0.0
        %835 = vmatprep.subr.mxu0 0.0
        %836 = vmatpush2.msra.mxu0 0.0
        %837 = vmatprep.subr.mxu0 0.0
        %838 = vmatpush2.msra.mxu0 0.0
        %839 = vmatprep.subr.mxu0 0.0
        %840 = vmatpush2.msra.mxu0 0.0
        %841 = vmatprep.subr.mxu0 0.0
        %842 = vmatpush2.msra.mxu0 0.0
        %843 = vmatprep.subr.mxu0 0.0
        %844 = vmatpush2.msra.mxu0 0.0
        %845 = vmatprep.subr.mxu0 0.0
        %846 = vmatpush2.msra.mxu0 0.0
        %847 = vmatprep.subr.mxu0 0.0
        %848 = vmatpush2.msra.mxu0 0.0
        %849 = vmatprep.subr.mxu0 0.0
        %850 = vmatpush2.msra.mxu0 0.0
        %851 = vmatprep.subr.mxu0 0.0
        %852 = vmatpush2.msra.mxu0 0.0
        %853 = vmatprep.subr.mxu0 0.0
        %854 = vmatpush2.msra.mxu0 0.0
        %855 = vmatprep.subr.mxu0 0.0
        %856 = vmatpush2.msra.mxu0 0.0
        %857 = vmatprep.subr.mxu0 0.0
        %858 = vmatpush2.msra.mxu0 0.0
        %859 = vmatprep.subr.mxu0 0.0
        %860 = vmatpush2.msra.mxu0 0.0
        %861 = vmatprep.subr.mxu0 0.0
        %862 = vmatpush2.msra.mxu0 0.0
        %863 = vmatprep.subr.mxu0 0.0
        %864 = vmatpush2.msra.mxu0 0.0
        %865 = vmatprep.mubr.f32.mxu0 0.0
        %866 = vmatmul.mubr.f32.gmra.mxu0 %v799
        %v867 = vpop.f32.mrf.mxu0
        %v868 = vadd.f32 0.0, %v867
        %v869 = vpop.f32.mrf.mxu0
        %870 = vdwg.mxu0
        %v871 = vadd.f32 %v797, %v868
        %v872 = vtanh.pop %v871
        %873 = vst.msk [vmem:[#allocation4 + $0x20] sm:$0xff] %vm475, %v872
        %v874 = vld [vmem:[#allocation3 + $0x28] sm:$0xff]
        %v876 = vsel %vm475, %v872, 0
        %878 = vmatprep.subr.mxu0 0.0
        %879 = vmatpush1.msra.mxu0 0.0
        %880 = vmatprep.subr.mxu0 0.0
        %881 = vmatpush1.msra.mxu0 0.0
        %882 = vmatprep.subr.mxu0 0.0
        %883 = vmatpush1.msra.mxu0 0.0
        %884 = vmatprep.subr.mxu0 0.0
        %885 = vmatpush1.msra.mxu0 0.0
        %886 = vmatprep.subr.mxu0 0.0
        %887 = vmatpush1.msra.mxu0 0.0
        %888 = vmatprep.subr.mxu0 0.0
        %889 = vmatpush1.msra.mxu0 0.0
        %890 = vmatprep.subr.mxu0 0.0
        %891 = vmatpush1.msra.mxu0 0.0
        %892 = vmatprep.subr.mxu0 0.0
        %893 = vmatpush1.msra.mxu0 0.0
        %894 = vmatprep.subr.mxu0 0.0
        %895 = vmatpush1.msra.mxu0 0.0
        %896 = vmatprep.subr.mxu0 0.0
        %897 = vmatpush1.msra.mxu0 0.0
        %898 = vmatprep.subr.mxu0 0.0
        %899 = vmatpush1.msra.mxu0 0.0
        %900 = vmatprep.subr.mxu0 0.0
        %901 = vmatpush1.msra.mxu0 0.0
        %902 = vmatprep.subr.mxu0 0.0
        %903 = vmatpush1.msra.mxu0 %v487
        %904 = vmatprep.subr.mxu0 0.0
        %905 = vmatpush1.msra.mxu0 %v486
        %906 = vmatprep.subr.mxu0 0.0
        %907 = vmatpush1.msra.mxu0 %v485
        %908 = vmatprep.subr.mxu0 0.0
        %909 = vmatpush1.msra.mxu0 %v484
        %910 = vmatprep.subr.mxu0 0.0
        %911 = vmatpush2.msra.mxu0 0.0
        %912 = vmatprep.subr.mxu0 0.0
        %913 = vmatpush2.msra.mxu0 0.0
        %914 = vmatprep.subr.mxu0 0.0
        %915 = vmatpush2.msra.mxu0 0.0
        %916 = vmatprep.subr.mxu0 0.0
        %917 = vmatpush2.msra.mxu0 0.0
        %918 = vmatprep.subr.mxu0 0.0
        %919 = vmatpush2.msra.mxu0 0.0
        %920 = vmatprep.subr.mxu0 0.0
        %921 = vmatpush2.msra.mxu0 0.0
        %922 = vmatprep.subr.mxu0 0.0
        %923 = vmatpush2.msra.mxu0 0.0
        %924 = vmatprep.subr.mxu0 0.0
        %925 = vmatpush2.msra.mxu0 0.0
        %926 = vmatprep.subr.mxu0 0.0
        %927 = vmatpush2.msra.mxu0 0.0
        %928 = vmatprep.subr.mxu0 0.0
        %929 = vmatpush2.msra.mxu0 0.0
        %930 = vmatprep.subr.mxu0 0.0
        %931 = vmatpush2.msra.mxu0 0.0
        %932 = vmatprep.subr.mxu0 0.0
        %933 = vmatpush2.msra.mxu0 0.0
        %934 = vmatprep.subr.mxu0 0.0
        %935 = vmatpush2.msra.mxu0 0.0
        %936 = vmatprep.subr.mxu0 0.0
        %937 = vmatpush2.msra.mxu0 0.0
        %938 = vmatprep.subr.mxu0 0.0
        %939 = vmatpush2.msra.mxu0 0.0
        %940 = vmatprep.subr.mxu0 0.0
        %941 = vmatpush2.msra.mxu0 0.0
        %942 = vmatprep.mubr.f32.mxu0 0.0
        %943 = vmatmul.mubr.f32.gmra.mxu0 %v876
        %v944 = vpop.f32.mrf.mxu0
        %v945 = vadd.f32 0.0, %v944
        %v946 = vpop.f32.mrf.mxu0
        %947 = vdwg.mxu0
        %v948 = vadd.f32 %v874, %v945
        %v949 = vtanh.pop %v948
        %950 = vst.msk [vmem:[#allocation4 + $0x28] sm:$0xff] %vm475, %v949
        %v951 = vld [vmem:[#allocation3 + $0x30] sm:$0xff]
        %v953 = vsel %vm475, %v949, 0
        %955 = vmatprep.subr.mxu0 0.0
        %956 = vmatpush1.msra.mxu0 0.0
        %957 = vmatprep.subr.mxu0 0.0
        %958 = vmatpush1.msra.mxu0 0.0
        %959 = vmatprep.subr.mxu0 0.0
        %960 = vmatpush1.msra.mxu0 0.0
        %961 = vmatprep.subr.mxu0 0.0
        %962 = vmatpush1.msra.mxu0 0.0
        %963 = vmatprep.subr.mxu0 0.0
        %964 = vmatpush1.msra.mxu0 0.0
        %965 = vmatprep.subr.mxu0 0.0
        %966 = vmatpush1.msra.mxu0 0.0
        %967 = vmatprep.subr.mxu0 0.0
        %968 = vmatpush1.msra.mxu0 0.0
        %969 = vmatprep.subr.mxu0 0.0
        %970 = vmatpush1.msra.mxu0 0.0
        %971 = vmatprep.subr.mxu0 0.0
        %972 = vmatpush1.msra.mxu0 0.0
        %973 = vmatprep.subr.mxu0 0.0
        %974 = vmatpush1.msra.mxu0 0.0
        %975 = vmatprep.subr.mxu0 0.0
        %976 = vmatpush1.msra.mxu0 0.0
        %977 = vmatprep.subr.mxu0 0.0
        %978 = vmatpush1.msra.mxu0 0.0
        %979 = vmatprep.subr.mxu0 0.0
        %980 = vmatpush1.msra.mxu0 %v487
        %981 = vmatprep.subr.mxu0 0.0
        %982 = vmatpush1.msra.mxu0 %v486
        %983 = vmatprep.subr.mxu0 0.0
        %984 = vmatpush1.msra.mxu0 %v485
        %985 = vmatprep.subr.mxu0 0.0
        %986 = vmatpush1.msra.mxu0 %v484
        %987 = vmatprep.subr.mxu0 0.0
        %988 = vmatpush2.msra.mxu0 0.0
        %989 = vmatprep.subr.mxu0 0.0
        %990 = vmatpush2.msra.mxu0 0.0
        %991 = vmatprep.subr.mxu0 0.0
        %992 = vmatpush2.msra.mxu0 0.0
        %993 = vmatprep.subr.mxu0 0.0
        %994 = vmatpush2.msra.mxu0 0.0
        %995 = vmatprep.subr.mxu0 0.0
        %996 = vmatpush2.msra.mxu0 0.0
        %997 = vmatprep.subr.mxu0 0.0
        %998 = vmatpush2.msra.mxu0 0.0
        %999 = vmatprep.subr.mxu0 0.0
        %1000 = vmatpush2.msra.mxu0 0.0
        %1001 = vmatprep.subr.mxu0 0.0
        %1002 = vmatpush2.msra.mxu0 0.0
        %1003 = vmatprep.subr.mxu0 0.0
        %1004 = vmatpush2.msra.mxu0 0.0
        %1005 = vmatprep.subr.mxu0 0.0
        %1006 = vmatpush2.msra.mxu0 0.0
        %1007 = vmatprep.subr.mxu0 0.0
        %1008 = vmatpush2.msra.mxu0 0.0
        %1009 = vmatprep.subr.mxu0 0.0
        %1010 = vmatpush2.msra.mxu0 0.0
        %1011 = vmatprep.subr.mxu0 0.0
        %1012 = vmatpush2.msra.mxu0 0.0
        %1013 = vmatprep.subr.mxu0 0.0
        %1014 = vmatpush2.msra.mxu0 0.0
        %1015 = vmatprep.subr.mxu0 0.0
        %1016 = vmatpush2.msra.mxu0 0.0
        %1017 = vmatprep.subr.mxu0 0.0
        %1018 = vmatpush2.msra.mxu0 0.0
        %1019 = vmatprep.mubr.f32.mxu0 0.0
        %1020 = vmatmul.mubr.f32.gmra.mxu0 %v953
        %v1021 = vpop.f32.mrf.mxu0
        %v1022 = vadd.f32 0.0, %v1021
        %v1023 = vpop.f32.mrf.mxu0
        %1024 = vdwg.mxu0
        %v1025 = vadd.f32 %v951, %v1022
        %v1026 = vtanh.pop %v1025
        %1027 = vst.msk [vmem:[#allocation4 + $0x30] sm:$0xff] %vm475, %v1026
        %v1028 = vld [vmem:[#allocation3 + $0x38] sm:$0xff]
        %v1030 = vsel %vm475, %v1026, 0
        %1032 = vmatprep.subr.mxu0 0.0
        %1033 = vmatpush1.msra.mxu0 0.0
        %1034 = vmatprep.subr.mxu0 0.0
        %1035 = vmatpush1.msra.mxu0 0.0
        %1036 = vmatprep.subr.mxu0 0.0
        %1037 = vmatpush1.msra.mxu0 0.0
        %1038 = vmatprep.subr.mxu0 0.0
        %1039 = vmatpush1.msra.mxu0 0.0
        %1040 = vmatprep.subr.mxu0 0.0
        %1041 = vmatpush1.msra.mxu0 0.0
        %1042 = vmatprep.subr.mxu0 0.0
        %1043 = vmatpush1.msra.mxu0 0.0
        %1044 = vmatprep.subr.mxu0 0.0
        %1045 = vmatpush1.msra.mxu0 0.0
        %1046 = vmatprep.subr.mxu0 0.0
        %1047 = vmatpush1.msra.mxu0 0.0
        %1048 = vmatprep.subr.mxu0 0.0
        %1049 = vmatpush1.msra.mxu0 0.0
        %1050 = vmatprep.subr.mxu0 0.0
        %1051 = vmatpush1.msra.mxu0 0.0
        %1052 = vmatprep.subr.mxu0 0.0
        %1053 = vmatpush1.msra.mxu0 0.0
        %1054 = vmatprep.subr.mxu0 0.0
        %1055 = vmatpush1.msra.mxu0 0.0
        %1056 = vmatprep.subr.mxu0 0.0
        %1057 = vmatpush1.msra.mxu0 %v487
        %1058 = vmatprep.subr.mxu0 0.0
        %1059 = vmatpush1.msra.mxu0 %v486
        %1060 = vmatprep.subr.mxu0 0.0
        %1061 = vmatpush1.msra.mxu0 %v485
        %1062 = vmatprep.subr.mxu0 0.0
        %1063 = vmatpush1.msra.mxu0 %v484
        %1064 = vmatprep.subr.mxu0 0.0
        %1065 = vmatpush2.msra.mxu0 0.0
        %1066 = vmatprep.subr.mxu0 0.0
        %1067 = vmatpush2.msra.mxu0 0.0
        %1068 = vmatprep.subr.mxu0 0.0
        %1069 = vmatpush2.msra.mxu0 0.0
        %1070 = vmatprep.subr.mxu0 0.0
        %1071 = vmatpush2.msra.mxu0 0.0
        %1072 = vmatprep.subr.mxu0 0.0
        %1073 = vmatpush2.msra.mxu0 0.0
        %1074 = vmatprep.subr.mxu0 0.0
        %1075 = vmatpush2.msra.mxu0 0.0
        %1076 = vmatprep.subr.mxu0 0.0
        %1077 = vmatpush2.msra.mxu0 0.0
        %1078 = vmatprep.subr.mxu0 0.0
        %1079 = vmatpush2.msra.mxu0 0.0
        %1080 = vmatprep.subr.mxu0 0.0
        %1081 = vmatpush2.msra.mxu0 0.0
        %1082 = vmatprep.subr.mxu0 0.0
        %1083 = vmatpush2.msra.mxu0 0.0
        %1084 = vmatprep.subr.mxu0 0.0
        %1085 = vmatpush2.msra.mxu0 0.0
        %1086 = vmatprep.subr.mxu0 0.0
        %1087 = vmatpush2.msra.mxu0 0.0
        %1088 = vmatprep.subr.mxu0 0.0
        %1089 = vmatpush2.msra.mxu0 0.0
        %1090 = vmatprep.subr.mxu0 0.0
        %1091 = vmatpush2.msra.mxu0 0.0
        %1092 = vmatprep.subr.mxu0 0.0
        %1093 = vmatpush2.msra.mxu0 0.0
        %1094 = vmatprep.subr.mxu0 0.0
        %1095 = vmatpush2.msra.mxu0 0.0
        %1096 = vmatprep.mubr.f32.mxu0 0.0
        %1097 = vmatmul.mubr.f32.gmra.mxu0 %v1030
        %v1098 = vpop.f32.mrf.mxu0
        %v1099 = vadd.f32 0.0, %v1098
        %v1100 = vpop.f32.mrf.mxu0
        %1101 = vdwg.mxu0
        %v1102 = vadd.f32 %v1028, %v1099
        %v1103 = vtanh.pop %v1102
        %1104 = vst.msk [vmem:[#allocation4 + $0x38] sm:$0xff] %vm475, %v1103
        %1105 = vst.msk [vmem:[#allocation2] sm:$0xff] %vm475, %v1103
        %v1106 = vld [vmem:[#allocation4] sm:$0xff]
        %v1107 = vld [vmem:[#allocation4 + $0x8] sm:$0xff]
        %v1108 = vld [vmem:[#allocation4 + $0x10] sm:$0xff]
        %v1109 = vld [vmem:[#allocation4 + $0x18] sm:$0xff]
        %v1110 = vld [vmem:[#allocation4 + $0x20] sm:$0xff]
        %v1111 = vld [vmem:[#allocation4 + $0x28] sm:$0xff]
        %v1112 = vld [vmem:[#allocation4 + $0x30] sm:$0xff]
        %v1113 = vld [vmem:[#allocation4 + $0x38] sm:$0xff]
        %v1114 = vld [vmem:[%s2] sm:$0xff]
        %v1115 = vld [vmem:[%s2 + $0x8] sm:$0xff]
        %v1116 = vld [vmem:[%s2 + $0x10] sm:$0xff]
        %v1117 = vld [vmem:[%s2 + $0x18] sm:$0xff]
        %v1118 = vld [vmem:[%s6] sm:$0x1]
        %v1120 = vlaneseq
        %v1121 = vshrl.u32 %v1120, 7
        %v1122 = vsub.s32 0, %v1121
        %v1123 = vrot.slane %v1118, %v1122
        %v1126 = vsel %vm475, %v1106, 0
        %v1129 = vsel %vm475, %v1107, 0
        %v1132 = vsel %vm475, %v1108, 0
        %v1135 = vsel %vm475, %v1109, 0
        %v1138 = vsel %vm475, %v1110, 0
        %v1141 = vsel %vm475, %v1111, 0
        %v1144 = vsel %vm475, %v1112, 0
        %v1147 = vsel %vm475, %v1113, 0
        %1149 = vmatprep.subr.mxu0 0.0
        %1150 = vmatpush1.msra.mxu0 0.0
        %1151 = vmatprep.subr.mxu0 0.0
        %1152 = vmatpush1.msra.mxu0 0.0
        %1153 = vmatprep.subr.mxu0 0.0
        %1154 = vmatpush1.msra.mxu0 0.0
        %1155 = vmatprep.subr.mxu0 0.0
        %1156 = vmatpush1.msra.mxu0 0.0
        %1157 = vmatprep.subr.mxu0 0.0
        %1158 = vmatpush1.msra.mxu0 0.0
        %1159 = vmatprep.subr.mxu0 0.0
        %1160 = vmatpush1.msra.mxu0 0.0
        %1161 = vmatprep.subr.mxu0 0.0
        %1162 = vmatpush1.msra.mxu0 0.0
        %1163 = vmatprep.subr.mxu0 0.0
        %1164 = vmatpush1.msra.mxu0 0.0
        %1165 = vmatprep.subr.mxu0 0.0
        %1166 = vmatpush1.msra.mxu0 0.0
        %1167 = vmatprep.subr.mxu0 0.0
        %1168 = vmatpush1.msra.mxu0 0.0
        %1169 = vmatprep.subr.mxu0 0.0
        %1170 = vmatpush1.msra.mxu0 0.0
        %1171 = vmatprep.subr.mxu0 0.0
        %1172 = vmatpush1.msra.mxu0 0.0
        %1173 = vmatprep.subr.mxu0 0.0
        %1174 = vmatpush1.msra.mxu0 %v1117
        %1175 = vmatprep.subr.mxu0 0.0
        %1176 = vmatpush1.msra.mxu0 %v1116
        %1177 = vmatprep.subr.mxu0 0.0
        %1178 = vmatpush1.msra.mxu0 %v1115
        %1179 = vmatprep.subr.mxu0 0.0
        %1180 = vmatpush1.msra.mxu0 %v1114
        %1181 = vmatprep.subr.mxu0 0.0
        %1182 = vmatpush2.msra.mxu0 0.0
        %1183 = vmatprep.subr.mxu0 0.0
        %1184 = vmatpush2.msra.mxu0 0.0
        %1185 = vmatprep.subr.mxu0 0.0
        %1186 = vmatpush2.msra.mxu0 0.0
        %1187 = vmatprep.subr.mxu0 0.0
        %1188 = vmatpush2.msra.mxu0 0.0
        %1189 = vmatprep.subr.mxu0 0.0
        %1190 = vmatpush2.msra.mxu0 0.0
        %1191 = vmatprep.subr.mxu0 0.0
        %1192 = vmatpush2.msra.mxu0 0.0
        %1193 = vmatprep.subr.mxu0 0.0
        %1194 = vmatpush2.msra.mxu0 0.0
        %1195 = vmatprep.subr.mxu0 0.0
        %1196 = vmatpush2.msra.mxu0 0.0
        %1197 = vmatprep.subr.mxu0 0.0
        %1198 = vmatpush2.msra.mxu0 0.0
        %1199 = vmatprep.subr.mxu0 0.0
        %1200 = vmatpush2.msra.mxu0 0.0
        %1201 = vmatprep.subr.mxu0 0.0
        %1202 = vmatpush2.msra.mxu0 0.0
        %1203 = vmatprep.subr.mxu0 0.0
        %1204 = vmatpush2.msra.mxu0 0.0
        %1205 = vmatprep.subr.mxu0 0.0
        %1206 = vmatpush2.msra.mxu0 0.0
        %1207 = vmatprep.subr.mxu0 0.0
        %1208 = vmatpush2.msra.mxu0 0.0
        %1209 = vmatprep.subr.mxu0 0.0
        %1210 = vmatpush2.msra.mxu0 0.0
        %1211 = vmatprep.subr.mxu0 0.0
        %1212 = vmatpush2.msra.mxu0 0.0
        %1213 = vmatprep.mubr.f32.mxu0 0.0
        %1214 = vmatmul.mubr.f32.gmra.mxu0 %v1126
        %v1215 = vpop.f32.mrf.mxu0
        %v1216 = vadd.f32 %v1123, %v1215
        %v1217 = vpop.f32.mrf.mxu0
        %1218 = vmatprep.mubr.f32.mxu0 0.0
        %1219 = vmatmul.mubr.f32.gmra.mxu0 %v1129
        %v1220 = vpop.f32.mrf.mxu0
        %v1221 = vadd.f32 %v1123, %v1220
        %v1222 = vpop.f32.mrf.mxu0
        %1223 = vmatprep.mubr.f32.mxu0 0.0
        %1224 = vmatmul.mubr.f32.gmra.mxu0 %v1132
        %v1225 = vpop.f32.mrf.mxu0
        %v1226 = vadd.f32 %v1123, %v1225
        %v1227 = vpop.f32.mrf.mxu0
        %1228 = vmatprep.mubr.f32.mxu0 0.0
        %1229 = vmatmul.mubr.f32.gmra.mxu0 %v1135
        %v1230 = vpop.f32.mrf.mxu0
        %v1231 = vadd.f32 %v1123, %v1230
        %v1232 = vpop.f32.mrf.mxu0
        %1233 = vmatprep.mubr.f32.mxu0 0.0
        %1234 = vmatmul.mubr.f32.gmra.mxu0 %v1138
        %v1235 = vpop.f32.mrf.mxu0
        %v1236 = vadd.f32 %v1123, %v1235
        %v1237 = vpop.f32.mrf.mxu0
        %1238 = vmatprep.mubr.f32.mxu0 0.0
        %1239 = vmatmul.mubr.f32.gmra.mxu0 %v1141
        %v1240 = vpop.f32.mrf.mxu0
        %v1241 = vadd.f32 %v1123, %v1240
        %v1242 = vpop.f32.mrf.mxu0
        %1243 = vmatprep.mubr.f32.mxu0 0.0
        %1244 = vmatmul.mubr.f32.gmra.mxu0 %v1144
        %v1245 = vpop.f32.mrf.mxu0
        %v1246 = vadd.f32 %v1123, %v1245
        %v1247 = vpop.f32.mrf.mxu0
        %1248 = vmatprep.mubr.f32.mxu0 0.0
        %1249 = vmatmul.mubr.f32.gmra.mxu0 %v1147
        %v1250 = vpop.f32.mrf.mxu0
        %v1251 = vadd.f32 %v1123, %v1250
        %v1252 = vpop.f32.mrf.mxu0
        %1253 = vdwg.mxu0
        %1254 = vst.msk [vmem:[#allocation3] sm:$0xff] %vm475, %v1216
        %1255 = vst.msk [vmem:[#allocation3 + $0x8] sm:$0xff] %vm475, %v1221
        %1256 = vst.msk [vmem:[#allocation3 + $0x10] sm:$0xff] %vm475, %v1226
        %1257 = vst.msk [vmem:[#allocation3 + $0x18] sm:$0xff] %vm475, %v1231
        %1258 = vst.msk [vmem:[#allocation3 + $0x20] sm:$0xff] %vm475, %v1236
        %1259 = vst.msk [vmem:[#allocation3 + $0x28] sm:$0xff] %vm475, %v1241
        %1260 = vst.msk [vmem:[#allocation3 + $0x30] sm:$0xff] %vm475, %v1246
        %1261 = vst.msk [vmem:[#allocation3 + $0x38] sm:$0xff] %vm475, %v1251
        %v1262 = vld [vmem:[%s4] sm:$0xff]
        %v1263 = vld [vmem:[%s4 + $0x8] sm:$0xff]
        %v1264 = vld [vmem:[%s4 + $0x10] sm:$0xff]
        %v1265 = vld [vmem:[%s4 + $0x18] sm:$0xff]
        %s1266 = scalar_lea.vmem [#allocation2], 8
        %v1267 = vld [vmem:[%s1266] sm:$0xff]
        %v1268 = vld [vmem:[#allocation3] sm:$0xff]
        %v1270 = vsel %vm475, %v1267, 0
        %1272 = vmatprep.subr.mxu0 0.0
        %1273 = vmatpush1.msra.mxu0 0.0
        %1274 = vmatprep.subr.mxu0 0.0
        %1275 = vmatpush1.msra.mxu0 0.0
        %1276 = vmatprep.subr.mxu0 0.0
        %1277 = vmatpush1.msra.mxu0 0.0
        %1278 = vmatprep.subr.mxu0 0.0
        %1279 = vmatpush1.msra.mxu0 0.0
        %1280 = vmatprep.subr.mxu0 0.0
        %1281 = vmatpush1.msra.mxu0 0.0
        %1282 = vmatprep.subr.mxu0 0.0
        %1283 = vmatpush1.msra.mxu0 0.0
        %1284 = vmatprep.subr.mxu0 0.0
        %1285 = vmatpush1.msra.mxu0 0.0
        %1286 = vmatprep.subr.mxu0 0.0
        %1287 = vmatpush1.msra.mxu0 0.0
        %1288 = vmatprep.subr.mxu0 0.0
        %1289 = vmatpush1.msra.mxu0 0.0
        %1290 = vmatprep.subr.mxu0 0.0
        %1291 = vmatpush1.msra.mxu0 0.0
        %1292 = vmatprep.subr.mxu0 0.0
        %1293 = vmatpush1.msra.mxu0 0.0
        %1294 = vmatprep.subr.mxu0 0.0
        %1295 = vmatpush1.msra.mxu0 0.0
        %1296 = vmatprep.subr.mxu0 0.0
        %1297 = vmatpush1.msra.mxu0 %v1265
        %1298 = vmatprep.subr.mxu0 0.0
        %1299 = vmatpush1.msra.mxu0 %v1264
        %1300 = vmatprep.subr.mxu0 0.0
        %1301 = vmatpush1.msra.mxu0 %v1263
        %1302 = vmatprep.subr.mxu0 0.0
        %1303 = vmatpush1.msra.mxu0 %v1262
        %1304 = vmatprep.subr.mxu0 0.0
        %1305 = vmatpush2.msra.mxu0 0.0
        %1306 = vmatprep.subr.mxu0 0.0
        %1307 = vmatpush2.msra.mxu0 0.0
        %1308 = vmatprep.subr.mxu0 0.0
        %1309 = vmatpush2.msra.mxu0 0.0
        %1310 = vmatprep.subr.mxu0 0.0
        %1311 = vmatpush2.msra.mxu0 0.0
        %1312 = vmatprep.subr.mxu0 0.0
        %1313 = vmatpush2.msra.mxu0 0.0
        %1314 = vmatprep.subr.mxu0 0.0
        %1315 = vmatpush2.msra.mxu0 0.0
        %1316 = vmatprep.subr.mxu0 0.0
        %1317 = vmatpush2.msra.mxu0 0.0
        %1318 = vmatprep.subr.mxu0 0.0
        %1319 = vmatpush2.msra.mxu0 0.0
        %1320 = vmatprep.subr.mxu0 0.0
        %1321 = vmatpush2.msra.mxu0 0.0
        %1322 = vmatprep.subr.mxu0 0.0
        %1323 = vmatpush2.msra.mxu0 0.0
        %1324 = vmatprep.subr.mxu0 0.0
        %1325 = vmatpush2.msra.mxu0 0.0
        %1326 = vmatprep.subr.mxu0 0.0
        %1327 = vmatpush2.msra.mxu0 0.0
        %1328 = vmatprep.subr.mxu0 0.0
        %1329 = vmatpush2.msra.mxu0 0.0
        %1330 = vmatprep.subr.mxu0 0.0
        %1331 = vmatpush2.msra.mxu0 0.0
        %1332 = vmatprep.subr.mxu0 0.0
        %1333 = vmatpush2.msra.mxu0 0.0
        %1334 = vmatprep.subr.mxu0 0.0
        %1335 = vmatpush2.msra.mxu0 0.0
        %1336 = vmatprep.mubr.f32.mxu0 0.0
        %1337 = vmatmul.mubr.f32.gmra.mxu0 %v1270
        %v1338 = vpop.f32.mrf.mxu0
        %v1339 = vadd.f32 0.0, %v1338
        %v1340 = vpop.f32.mrf.mxu0
        %1341 = vdwg.mxu0
        %v1342 = vadd.f32 %v1268, %v1339
        %v1343 = vtanh.pop %v1342
        %v1344 = vld [vmem:[#allocation3 + $0x8] sm:$0xff]
        %v1346 = vsel %vm475, %v1343, 0
        %1348 = vmatprep.subr.mxu0 0.0
        %1349 = vmatpush1.msra.mxu0 0.0
        %1350 = vmatprep.subr.mxu0 0.0
        %1351 = vmatpush1.msra.mxu0 0.0
        %1352 = vmatprep.subr.mxu0 0.0
        %1353 = vmatpush1.msra.mxu0 0.0
        %1354 = vmatprep.subr.mxu0 0.0
        %1355 = vmatpush1.msra.mxu0 0.0
        %1356 = vmatprep.subr.mxu0 0.0
        %1357 = vmatpush1.msra.mxu0 0.0
        %1358 = vmatprep.subr.mxu0 0.0
        %1359 = vmatpush1.msra.mxu0 0.0
        %1360 = vmatprep.subr.mxu0 0.0
        %1361 = vmatpush1.msra.mxu0 0.0
        %1362 = vmatprep.subr.mxu0 0.0
        %1363 = vmatpush1.msra.mxu0 0.0
        %1364 = vmatprep.subr.mxu0 0.0
        %1365 = vmatpush1.msra.mxu0 0.0
        %1366 = vmatprep.subr.mxu0 0.0
        %1367 = vmatpush1.msra.mxu0 0.0
        %1368 = vmatprep.subr.mxu0 0.0
        %1369 = vmatpush1.msra.mxu0 0.0
        %1370 = vmatprep.subr.mxu0 0.0
        %1371 = vmatpush1.msra.mxu0 0.0
        %1372 = vmatprep.subr.mxu0 0.0
        %1373 = vmatpush1.msra.mxu0 %v1265
        %1374 = vmatprep.subr.mxu0 0.0
        %1375 = vmatpush1.msra.mxu0 %v1264
        %1376 = vmatprep.subr.mxu0 0.0
        %1377 = vmatpush1.msra.mxu0 %v1263
        %1378 = vmatprep.subr.mxu0 0.0
        %1379 = vmatpush1.msra.mxu0 %v1262
        %1380 = vmatprep.subr.mxu0 0.0
        %1381 = vmatpush2.msra.mxu0 0.0
        %1382 = vmatprep.subr.mxu0 0.0
        %1383 = vmatpush2.msra.mxu0 0.0
        %1384 = vmatprep.subr.mxu0 0.0
        %1385 = vmatpush2.msra.mxu0 0.0
        %1386 = vmatprep.subr.mxu0 0.0
        %1387 = vmatpush2.msra.mxu0 0.0
        %1388 = vmatprep.subr.mxu0 0.0
        %1389 = vmatpush2.msra.mxu0 0.0
        %1390 = vmatprep.subr.mxu0 0.0
        %1391 = vmatpush2.msra.mxu0 0.0
        %1392 = vmatprep.subr.mxu0 0.0
        %1393 = vmatpush2.msra.mxu0 0.0
        %1394 = vmatprep.subr.mxu0 0.0
        %1395 = vmatpush2.msra.mxu0 0.0
        %1396 = vmatprep.subr.mxu0 0.0
        %1397 = vmatpush2.msra.mxu0 0.0
        %1398 = vmatprep.subr.mxu0 0.0
        %1399 = vmatpush2.msra.mxu0 0.0
        %1400 = vmatprep.subr.mxu0 0.0
        %1401 = vmatpush2.msra.mxu0 0.0
        %1402 = vmatprep.subr.mxu0 0.0
        %1403 = vmatpush2.msra.mxu0 0.0
        %1404 = vmatprep.subr.mxu0 0.0
        %1405 = vmatpush2.msra.mxu0 0.0
        %1406 = vmatprep.subr.mxu0 0.0
        %1407 = vmatpush2.msra.mxu0 0.0
        %1408 = vmatprep.subr.mxu0 0.0
        %1409 = vmatpush2.msra.mxu0 0.0
        %1410 = vmatprep.subr.mxu0 0.0
        %1411 = vmatpush2.msra.mxu0 0.0
        %1412 = vmatprep.mubr.f32.mxu0 0.0
        %1413 = vmatmul.mubr.f32.gmra.mxu0 %v1346
        %v1414 = vpop.f32.mrf.mxu0
        %v1415 = vadd.f32 0.0, %v1414
        %v1416 = vpop.f32.mrf.mxu0
        %1417 = vdwg.mxu0
        %v1418 = vadd.f32 %v1344, %v1415
        %v1419 = vtanh.pop %v1418
        %v1420 = vld [vmem:[#allocation3 + $0x10] sm:$0xff]
        %v1422 = vsel %vm475, %v1419, 0
        %1424 = vmatprep.subr.mxu0 0.0
        %1425 = vmatpush1.msra.mxu0 0.0
        %1426 = vmatprep.subr.mxu0 0.0
        %1427 = vmatpush1.msra.mxu0 0.0
        %1428 = vmatprep.subr.mxu0 0.0
        %1429 = vmatpush1.msra.mxu0 0.0
        %1430 = vmatprep.subr.mxu0 0.0
        %1431 = vmatpush1.msra.mxu0 0.0
        %1432 = vmatprep.subr.mxu0 0.0
        %1433 = vmatpush1.msra.mxu0 0.0
        %1434 = vmatprep.subr.mxu0 0.0
        %1435 = vmatpush1.msra.mxu0 0.0
        %1436 = vmatprep.subr.mxu0 0.0
        %1437 = vmatpush1.msra.mxu0 0.0
        %1438 = vmatprep.subr.mxu0 0.0
        %1439 = vmatpush1.msra.mxu0 0.0
        %1440 = vmatprep.subr.mxu0 0.0
        %1441 = vmatpush1.msra.mxu0 0.0
        %1442 = vmatprep.subr.mxu0 0.0
        %1443 = vmatpush1.msra.mxu0 0.0
        %1444 = vmatprep.subr.mxu0 0.0
        %1445 = vmatpush1.msra.mxu0 0.0
        %1446 = vmatprep.subr.mxu0 0.0
        %1447 = vmatpush1.msra.mxu0 0.0
        %1448 = vmatprep.subr.mxu0 0.0
        %1449 = vmatpush1.msra.mxu0 %v1265
        %1450 = vmatprep.subr.mxu0 0.0
        %1451 = vmatpush1.msra.mxu0 %v1264
        %1452 = vmatprep.subr.mxu0 0.0
        %1453 = vmatpush1.msra.mxu0 %v1263
        %1454 = vmatprep.subr.mxu0 0.0
        %1455 = vmatpush1.msra.mxu0 %v1262
        %1456 = vmatprep.subr.mxu0 0.0
        %1457 = vmatpush2.msra.mxu0 0.0
        %1458 = vmatprep.subr.mxu0 0.0
        %1459 = vmatpush2.msra.mxu0 0.0
        %1460 = vmatprep.subr.mxu0 0.0
        %1461 = vmatpush2.msra.mxu0 0.0
        %1462 = vmatprep.subr.mxu0 0.0
        %1463 = vmatpush2.msra.mxu0 0.0
        %1464 = vmatprep.subr.mxu0 0.0
        %1465 = vmatpush2.msra.mxu0 0.0
        %1466 = vmatprep.subr.mxu0 0.0
        %1467 = vmatpush2.msra.mxu0 0.0
        %1468 = vmatprep.subr.mxu0 0.0
        %1469 = vmatpush2.msra.mxu0 0.0
        %1470 = vmatprep.subr.mxu0 0.0
        %1471 = vmatpush2.msra.mxu0 0.0
        %1472 = vmatprep.subr.mxu0 0.0
        %1473 = vmatpush2.msra.mxu0 0.0
        %1474 = vmatprep.subr.mxu0 0.0
        %1475 = vmatpush2.msra.mxu0 0.0
        %1476 = vmatprep.subr.mxu0 0.0
        %1477 = vmatpush2.msra.mxu0 0.0
        %1478 = vmatprep.subr.mxu0 0.0
        %1479 = vmatpush2.msra.mxu0 0.0
        %1480 = vmatprep.subr.mxu0 0.0
        %1481 = vmatpush2.msra.mxu0 0.0
        %1482 = vmatprep.subr.mxu0 0.0
        %1483 = vmatpush2.msra.mxu0 0.0
        %1484 = vmatprep.subr.mxu0 0.0
        %1485 = vmatpush2.msra.mxu0 0.0
        %1486 = vmatprep.subr.mxu0 0.0
        %1487 = vmatpush2.msra.mxu0 0.0
        %1488 = vmatprep.mubr.f32.mxu0 0.0
        %1489 = vmatmul.mubr.f32.gmra.mxu0 %v1422
        %v1490 = vpop.f32.mrf.mxu0
        %v1491 = vadd.f32 0.0, %v1490
        %v1492 = vpop.f32.mrf.mxu0
        %1493 = vdwg.mxu0
        %v1494 = vadd.f32 %v1420, %v1491
        %v1495 = vtanh.pop %v1494
        %v1496 = vld [vmem:[#allocation3 + $0x18] sm:$0xff]
        %v1498 = vsel %vm475, %v1495, 0
        %1500 = vmatprep.subr.mxu0 0.0
        %1501 = vmatpush1.msra.mxu0 0.0
        %1502 = vmatprep.subr.mxu0 0.0
        %1503 = vmatpush1.msra.mxu0 0.0
        %1504 = vmatprep.subr.mxu0 0.0
        %1505 = vmatpush1.msra.mxu0 0.0
        %1506 = vmatprep.subr.mxu0 0.0
        %1507 = vmatpush1.msra.mxu0 0.0
        %1508 = vmatprep.subr.mxu0 0.0
        %1509 = vmatpush1.msra.mxu0 0.0
        %1510 = vmatprep.subr.mxu0 0.0
        %1511 = vmatpush1.msra.mxu0 0.0
        %1512 = vmatprep.subr.mxu0 0.0
        %1513 = vmatpush1.msra.mxu0 0.0
        %1514 = vmatprep.subr.mxu0 0.0
        %1515 = vmatpush1.msra.mxu0 0.0
        %1516 = vmatprep.subr.mxu0 0.0
        %1517 = vmatpush1.msra.mxu0 0.0
        %1518 = vmatprep.subr.mxu0 0.0
        %1519 = vmatpush1.msra.mxu0 0.0
        %1520 = vmatprep.subr.mxu0 0.0
        %1521 = vmatpush1.msra.mxu0 0.0
        %1522 = vmatprep.subr.mxu0 0.0
        %1523 = vmatpush1.msra.mxu0 0.0
        %1524 = vmatprep.subr.mxu0 0.0
        %1525 = vmatpush1.msra.mxu0 %v1265
        %1526 = vmatprep.subr.mxu0 0.0
        %1527 = vmatpush1.msra.mxu0 %v1264
        %1528 = vmatprep.subr.mxu0 0.0
        %1529 = vmatpush1.msra.mxu0 %v1263
        %1530 = vmatprep.subr.mxu0 0.0
        %1531 = vmatpush1.msra.mxu0 %v1262
        %1532 = vmatprep.subr.mxu0 0.0
        %1533 = vmatpush2.msra.mxu0 0.0
        %1534 = vmatprep.subr.mxu0 0.0
        %1535 = vmatpush2.msra.mxu0 0.0
        %1536 = vmatprep.subr.mxu0 0.0
        %1537 = vmatpush2.msra.mxu0 0.0
        %1538 = vmatprep.subr.mxu0 0.0
        %1539 = vmatpush2.msra.mxu0 0.0
        %1540 = vmatprep.subr.mxu0 0.0
        %1541 = vmatpush2.msra.mxu0 0.0
        %1542 = vmatprep.subr.mxu0 0.0
        %1543 = vmatpush2.msra.mxu0 0.0
        %1544 = vmatprep.subr.mxu0 0.0
        %1545 = vmatpush2.msra.mxu0 0.0
        %1546 = vmatprep.subr.mxu0 0.0
        %1547 = vmatpush2.msra.mxu0 0.0
        %1548 = vmatprep.subr.mxu0 0.0
        %1549 = vmatpush2.msra.mxu0 0.0
        %1550 = vmatprep.subr.mxu0 0.0
        %1551 = vmatpush2.msra.mxu0 0.0
        %1552 = vmatprep.subr.mxu0 0.0
        %1553 = vmatpush2.msra.mxu0 0.0
        %1554 = vmatprep.subr.mxu0 0.0
        %1555 = vmatpush2.msra.mxu0 0.0
        %1556 = vmatprep.subr.mxu0 0.0
        %1557 = vmatpush2.msra.mxu0 0.0
        %1558 = vmatprep.subr.mxu0 0.0
        %1559 = vmatpush2.msra.mxu0 0.0
        %1560 = vmatprep.subr.mxu0 0.0
        %1561 = vmatpush2.msra.mxu0 0.0
        %1562 = vmatprep.subr.mxu0 0.0
        %1563 = vmatpush2.msra.mxu0 0.0
        %1564 = vmatprep.mubr.f32.mxu0 0.0
        %1565 = vmatmul.mubr.f32.gmra.mxu0 %v1498
        %v1566 = vpop.f32.mrf.mxu0
        %v1567 = vadd.f32 0.0, %v1566
        %v1568 = vpop.f32.mrf.mxu0
        %1569 = vdwg.mxu0
        %v1570 = vadd.f32 %v1496, %v1567
        %v1571 = vtanh.pop %v1570
        %v1572 = vld [vmem:[#allocation3 + $0x20] sm:$0xff]
        %v1574 = vsel %vm475, %v1571, 0
        %1576 = vmatprep.subr.mxu0 0.0
        %1577 = vmatpush1.msra.mxu0 0.0
        %1578 = vmatprep.subr.mxu0 0.0
        %1579 = vmatpush1.msra.mxu0 0.0
        %1580 = vmatprep.subr.mxu0 0.0
        %1581 = vmatpush1.msra.mxu0 0.0
        %1582 = vmatprep.subr.mxu0 0.0
        %1583 = vmatpush1.msra.mxu0 0.0
        %1584 = vmatprep.subr.mxu0 0.0
        %1585 = vmatpush1.msra.mxu0 0.0
        %1586 = vmatprep.subr.mxu0 0.0
        %1587 = vmatpush1.msra.mxu0 0.0
        %1588 = vmatprep.subr.mxu0 0.0
        %1589 = vmatpush1.msra.mxu0 0.0
        %1590 = vmatprep.subr.mxu0 0.0
        %1591 = vmatpush1.msra.mxu0 0.0
        %1592 = vmatprep.subr.mxu0 0.0
        %1593 = vmatpush1.msra.mxu0 0.0
        %1594 = vmatprep.subr.mxu0 0.0
        %1595 = vmatpush1.msra.mxu0 0.0
        %1596 = vmatprep.subr.mxu0 0.0
        %1597 = vmatpush1.msra.mxu0 0.0
        %1598 = vmatprep.subr.mxu0 0.0
        %1599 = vmatpush1.msra.mxu0 0.0
        %1600 = vmatprep.subr.mxu0 0.0
        %1601 = vmatpush1.msra.mxu0 %v1265
        %1602 = vmatprep.subr.mxu0 0.0
        %1603 = vmatpush1.msra.mxu0 %v1264
        %1604 = vmatprep.subr.mxu0 0.0
        %1605 = vmatpush1.msra.mxu0 %v1263
        %1606 = vmatprep.subr.mxu0 0.0
        %1607 = vmatpush1.msra.mxu0 %v1262
        %1608 = vmatprep.subr.mxu0 0.0
        %1609 = vmatpush2.msra.mxu0 0.0
        %1610 = vmatprep.subr.mxu0 0.0
        %1611 = vmatpush2.msra.mxu0 0.0
        %1612 = vmatprep.subr.mxu0 0.0
        %1613 = vmatpush2.msra.mxu0 0.0
        %1614 = vmatprep.subr.mxu0 0.0
        %1615 = vmatpush2.msra.mxu0 0.0
        %1616 = vmatprep.subr.mxu0 0.0
        %1617 = vmatpush2.msra.mxu0 0.0
        %1618 = vmatprep.subr.mxu0 0.0
        %1619 = vmatpush2.msra.mxu0 0.0
        %1620 = vmatprep.subr.mxu0 0.0
        %1621 = vmatpush2.msra.mxu0 0.0
        %1622 = vmatprep.subr.mxu0 0.0
        %1623 = vmatpush2.msra.mxu0 0.0
        %1624 = vmatprep.subr.mxu0 0.0
        %1625 = vmatpush2.msra.mxu0 0.0
        %1626 = vmatprep.subr.mxu0 0.0
        %1627 = vmatpush2.msra.mxu0 0.0
        %1628 = vmatprep.subr.mxu0 0.0
        %1629 = vmatpush2.msra.mxu0 0.0
        %1630 = vmatprep.subr.mxu0 0.0
        %1631 = vmatpush2.msra.mxu0 0.0
        %1632 = vmatprep.subr.mxu0 0.0
        %1633 = vmatpush2.msra.mxu0 0.0
        %1634 = vmatprep.subr.mxu0 0.0
        %1635 = vmatpush2.msra.mxu0 0.0
        %1636 = vmatprep.subr.mxu0 0.0
        %1637 = vmatpush2.msra.mxu0 0.0
        %1638 = vmatprep.subr.mxu0 0.0
        %1639 = vmatpush2.msra.mxu0 0.0
        %1640 = vmatprep.mubr.f32.mxu0 0.0
        %1641 = vmatmul.mubr.f32.gmra.mxu0 %v1574
        %v1642 = vpop.f32.mrf.mxu0
        %v1643 = vadd.f32 0.0, %v1642
        %v1644 = vpop.f32.mrf.mxu0
        %1645 = vdwg.mxu0
        %v1646 = vadd.f32 %v1572, %v1643
        %v1647 = vtanh.pop %v1646
        %v1648 = vld [vmem:[#allocation3 + $0x28] sm:$0xff]
        %v1650 = vsel %vm475, %v1647, 0
        %1652 = vmatprep.subr.mxu0 0.0
        %1653 = vmatpush1.msra.mxu0 0.0
        %1654 = vmatprep.subr.mxu0 0.0
        %1655 = vmatpush1.msra.mxu0 0.0
        %1656 = vmatprep.subr.mxu0 0.0
        %1657 = vmatpush1.msra.mxu0 0.0
        %1658 = vmatprep.subr.mxu0 0.0
        %1659 = vmatpush1.msra.mxu0 0.0
        %1660 = vmatprep.subr.mxu0 0.0
        %1661 = vmatpush1.msra.mxu0 0.0
        %1662 = vmatprep.subr.mxu0 0.0
        %1663 = vmatpush1.msra.mxu0 0.0
        %1664 = vmatprep.subr.mxu0 0.0
        %1665 = vmatpush1.msra.mxu0 0.0
        %1666 = vmatprep.subr.mxu0 0.0
        %1667 = vmatpush1.msra.mxu0 0.0
        %1668 = vmatprep.subr.mxu0 0.0
        %1669 = vmatpush1.msra.mxu0 0.0
        %1670 = vmatprep.subr.mxu0 0.0
        %1671 = vmatpush1.msra.mxu0 0.0
        %1672 = vmatprep.subr.mxu0 0.0
        %1673 = vmatpush1.msra.mxu0 0.0
        %1674 = vmatprep.subr.mxu0 0.0
        %1675 = vmatpush1.msra.mxu0 0.0
        %1676 = vmatprep.subr.mxu0 0.0
        %1677 = vmatpush1.msra.mxu0 %v1265
        %1678 = vmatprep.subr.mxu0 0.0
        %1679 = vmatpush1.msra.mxu0 %v1264
        %1680 = vmatprep.subr.mxu0 0.0
        %1681 = vmatpush1.msra.mxu0 %v1263
        %1682 = vmatprep.subr.mxu0 0.0
        %1683 = vmatpush1.msra.mxu0 %v1262
        %1684 = vmatprep.subr.mxu0 0.0
        %1685 = vmatpush2.msra.mxu0 0.0
        %1686 = vmatprep.subr.mxu0 0.0
        %1687 = vmatpush2.msra.mxu0 0.0
        %1688 = vmatprep.subr.mxu0 0.0
        %1689 = vmatpush2.msra.mxu0 0.0
        %1690 = vmatprep.subr.mxu0 0.0
        %1691 = vmatpush2.msra.mxu0 0.0
        %1692 = vmatprep.subr.mxu0 0.0
        %1693 = vmatpush2.msra.mxu0 0.0
        %1694 = vmatprep.subr.mxu0 0.0
        %1695 = vmatpush2.msra.mxu0 0.0
        %1696 = vmatprep.subr.mxu0 0.0
        %1697 = vmatpush2.msra.mxu0 0.0
        %1698 = vmatprep.subr.mxu0 0.0
        %1699 = vmatpush2.msra.mxu0 0.0
        %1700 = vmatprep.subr.mxu0 0.0
        %1701 = vmatpush2.msra.mxu0 0.0
        %1702 = vmatprep.subr.mxu0 0.0
        %1703 = vmatpush2.msra.mxu0 0.0
        %1704 = vmatprep.subr.mxu0 0.0
        %1705 = vmatpush2.msra.mxu0 0.0
        %1706 = vmatprep.subr.mxu0 0.0
        %1707 = vmatpush2.msra.mxu0 0.0
        %1708 = vmatprep.subr.mxu0 0.0
        %1709 = vmatpush2.msra.mxu0 0.0
        %1710 = vmatprep.subr.mxu0 0.0
        %1711 = vmatpush2.msra.mxu0 0.0
        %1712 = vmatprep.subr.mxu0 0.0
        %1713 = vmatpush2.msra.mxu0 0.0
        %1714 = vmatprep.subr.mxu0 0.0
        %1715 = vmatpush2.msra.mxu0 0.0
        %1716 = vmatprep.mubr.f32.mxu0 0.0
        %1717 = vmatmul.mubr.f32.gmra.mxu0 %v1650
        %v1718 = vpop.f32.mrf.mxu0
        %v1719 = vadd.f32 0.0, %v1718
        %v1720 = vpop.f32.mrf.mxu0
        %1721 = vdwg.mxu0
        %v1722 = vadd.f32 %v1648, %v1719
        %v1723 = vtanh.pop %v1722
        %v1724 = vld [vmem:[#allocation3 + $0x30] sm:$0xff]
        %v1726 = vsel %vm475, %v1723, 0
        %1728 = vmatprep.subr.mxu0 0.0
        %1729 = vmatpush1.msra.mxu0 0.0
        %1730 = vmatprep.subr.mxu0 0.0
        %1731 = vmatpush1.msra.mxu0 0.0
        %1732 = vmatprep.subr.mxu0 0.0
        %1733 = vmatpush1.msra.mxu0 0.0
        %1734 = vmatprep.subr.mxu0 0.0
        %1735 = vmatpush1.msra.mxu0 0.0
        %1736 = vmatprep.subr.mxu0 0.0
        %1737 = vmatpush1.msra.mxu0 0.0
        %1738 = vmatprep.subr.mxu0 0.0
        %1739 = vmatpush1.msra.mxu0 0.0
        %1740 = vmatprep.subr.mxu0 0.0
        %1741 = vmatpush1.msra.mxu0 0.0
        %1742 = vmatprep.subr.mxu0 0.0
        %1743 = vmatpush1.msra.mxu0 0.0
        %1744 = vmatprep.subr.mxu0 0.0
        %1745 = vmatpush1.msra.mxu0 0.0
        %1746 = vmatprep.subr.mxu0 0.0
        %1747 = vmatpush1.msra.mxu0 0.0
        %1748 = vmatprep.subr.mxu0 0.0
        %1749 = vmatpush1.msra.mxu0 0.0
        %1750 = vmatprep.subr.mxu0 0.0
        %1751 = vmatpush1.msra.mxu0 0.0
        %1752 = vmatprep.subr.mxu0 0.0
        %1753 = vmatpush1.msra.mxu0 %v1265
        %1754 = vmatprep.subr.mxu0 0.0
        %1755 = vmatpush1.msra.mxu0 %v1264
        %1756 = vmatprep.subr.mxu0 0.0
        %1757 = vmatpush1.msra.mxu0 %v1263
        %1758 = vmatprep.subr.mxu0 0.0
        %1759 = vmatpush1.msra.mxu0 %v1262
        %1760 = vmatprep.subr.mxu0 0.0
        %1761 = vmatpush2.msra.mxu0 0.0
        %1762 = vmatprep.subr.mxu0 0.0
        %1763 = vmatpush2.msra.mxu0 0.0
        %1764 = vmatprep.subr.mxu0 0.0
        %1765 = vmatpush2.msra.mxu0 0.0
        %1766 = vmatprep.subr.mxu0 0.0
        %1767 = vmatpush2.msra.mxu0 0.0
        %1768 = vmatprep.subr.mxu0 0.0
        %1769 = vmatpush2.msra.mxu0 0.0
        %1770 = vmatprep.subr.mxu0 0.0
        %1771 = vmatpush2.msra.mxu0 0.0
        %1772 = vmatprep.subr.mxu0 0.0
        %1773 = vmatpush2.msra.mxu0 0.0
        %1774 = vmatprep.subr.mxu0 0.0
        %1775 = vmatpush2.msra.mxu0 0.0
        %1776 = vmatprep.subr.mxu0 0.0
        %1777 = vmatpush2.msra.mxu0 0.0
        %1778 = vmatprep.subr.mxu0 0.0
        %1779 = vmatpush2.msra.mxu0 0.0
        %1780 = vmatprep.subr.mxu0 0.0
        %1781 = vmatpush2.msra.mxu0 0.0
        %1782 = vmatprep.subr.mxu0 0.0
        %1783 = vmatpush2.msra.mxu0 0.0
        %1784 = vmatprep.subr.mxu0 0.0
        %1785 = vmatpush2.msra.mxu0 0.0
        %1786 = vmatprep.subr.mxu0 0.0
        %1787 = vmatpush2.msra.mxu0 0.0
        %1788 = vmatprep.subr.mxu0 0.0
        %1789 = vmatpush2.msra.mxu0 0.0
        %1790 = vmatprep.subr.mxu0 0.0
        %1791 = vmatpush2.msra.mxu0 0.0
        %1792 = vmatprep.mubr.f32.mxu0 0.0
        %1793 = vmatmul.mubr.f32.gmra.mxu0 %v1726
        %v1794 = vpop.f32.mrf.mxu0
        %v1795 = vadd.f32 0.0, %v1794
        %v1796 = vpop.f32.mrf.mxu0
        %1797 = vdwg.mxu0
        %v1798 = vadd.f32 %v1724, %v1795
        %v1799 = vtanh.pop %v1798
        %v1800 = vld [vmem:[#allocation3 + $0x38] sm:$0xff]
        %v1802 = vsel %vm475, %v1799, 0
        %1804 = vmatprep.subr.mxu0 0.0
        %1805 = vmatpush1.msra.mxu0 0.0
        %1806 = vmatprep.subr.mxu0 0.0
        %1807 = vmatpush1.msra.mxu0 0.0
        %1808 = vmatprep.subr.mxu0 0.0
        %1809 = vmatpush1.msra.mxu0 0.0
        %1810 = vmatprep.subr.mxu0 0.0
        %1811 = vmatpush1.msra.mxu0 0.0
        %1812 = vmatprep.subr.mxu0 0.0
        %1813 = vmatpush1.msra.mxu0 0.0
        %1814 = vmatprep.subr.mxu0 0.0
        %1815 = vmatpush1.msra.mxu0 0.0
        %1816 = vmatprep.subr.mxu0 0.0
        %1817 = vmatpush1.msra.mxu0 0.0
        %1818 = vmatprep.subr.mxu0 0.0
        %1819 = vmatpush1.msra.mxu0 0.0
        %1820 = vmatprep.subr.mxu0 0.0
        %1821 = vmatpush1.msra.mxu0 0.0
        %1822 = vmatprep.subr.mxu0 0.0
        %1823 = vmatpush1.msra.mxu0 0.0
        %1824 = vmatprep.subr.mxu0 0.0
        %1825 = vmatpush1.msra.mxu0 0.0
        %1826 = vmatprep.subr.mxu0 0.0
        %1827 = vmatpush1.msra.mxu0 0.0
        %1828 = vmatprep.subr.mxu0 0.0
        %1829 = vmatpush1.msra.mxu0 %v1265
        %1830 = vmatprep.subr.mxu0 0.0
        %1831 = vmatpush1.msra.mxu0 %v1264
        %1832 = vmatprep.subr.mxu0 0.0
        %1833 = vmatpush1.msra.mxu0 %v1263
        %1834 = vmatprep.subr.mxu0 0.0
        %1835 = vmatpush1.msra.mxu0 %v1262
        %1836 = vmatprep.subr.mxu0 0.0
        %1837 = vmatpush2.msra.mxu0 0.0
        %1838 = vmatprep.subr.mxu0 0.0
        %1839 = vmatpush2.msra.mxu0 0.0
        %1840 = vmatprep.subr.mxu0 0.0
        %1841 = vmatpush2.msra.mxu0 0.0
        %1842 = vmatprep.subr.mxu0 0.0
        %1843 = vmatpush2.msra.mxu0 0.0
        %1844 = vmatprep.subr.mxu0 0.0
        %1845 = vmatpush2.msra.mxu0 0.0
        %1846 = vmatprep.subr.mxu0 0.0
        %1847 = vmatpush2.msra.mxu0 0.0
        %1848 = vmatprep.subr.mxu0 0.0
        %1849 = vmatpush2.msra.mxu0 0.0
        %1850 = vmatprep.subr.mxu0 0.0
        %1851 = vmatpush2.msra.mxu0 0.0
        %1852 = vmatprep.subr.mxu0 0.0
        %1853 = vmatpush2.msra.mxu0 0.0
        %1854 = vmatprep.subr.mxu0 0.0
        %1855 = vmatpush2.msra.mxu0 0.0
        %1856 = vmatprep.subr.mxu0 0.0
        %1857 = vmatpush2.msra.mxu0 0.0
        %1858 = vmatprep.subr.mxu0 0.0
        %1859 = vmatpush2.msra.mxu0 0.0
        %1860 = vmatprep.subr.mxu0 0.0
        %1861 = vmatpush2.msra.mxu0 0.0
        %1862 = vmatprep.subr.mxu0 0.0
        %1863 = vmatpush2.msra.mxu0 0.0
        %1864 = vmatprep.subr.mxu0 0.0
        %1865 = vmatpush2.msra.mxu0 0.0
        %1866 = vmatprep.subr.mxu0 0.0
        %1867 = vmatpush2.msra.mxu0 0.0
        %1868 = vmatprep.mubr.f32.mxu0 0.0
        %1869 = vmatmul.mubr.f32.gmra.mxu0 %v1802
        %v1870 = vpop.f32.mrf.mxu0
        %v1871 = vadd.f32 0.0, %v1870
        %v1872 = vpop.f32.mrf.mxu0
        %1873 = vdwg.mxu0
        %v1874 = vadd.f32 %v1800, %v1871
        %v1875 = vtanh.pop %v1874
        %1876 = vst.msk [vmem:[%s1266] sm:$0xff] %vm475, %v1875
        %p1877 = scmp.eq.s32.totalorder %s21, 1
        // Predicated region
        $region61: #{tpu_custom_call.1} parent=55 // pred_check
          %p1878 = pneg %p1877
        $region62: #{tpu_custom_call.1} parent=55 // pred_check_branch
          %1880 = sbr.rel (%p1878) target = $region64
        $region63: #{tpu_custom_call.1} parent=55 // pred_region
          %v1881 = vld [vmem:[%s7] sm:$0xff]
          %v1882 = vld [vmem:[%s7 + $0x8] sm:$0xff]
          %v1883 = vld [vmem:[%s7 + $0x10] sm:$0xff]
          %v1884 = vld [vmem:[%s7 + $0x18] sm:$0xff]
          %v1885 = vld [vmem:[%s8] sm:$0x1]
          %v1887 = vlaneseq
          %v1888 = vshrl.u32 %v1887, 7
          %v1889 = vsub.s32 0, %v1888
          %v1890 = vrot.slane %v1885, %v1889
          %v1893 = vsel %vm475, %v1875, 0
          %1895 = vmatprep.subr.mxu0 0.0
          %1896 = vmatpush1.msra.mxu0 0.0
          %1897 = vmatprep.subr.mxu0 0.0
          %1898 = vmatpush1.msra.mxu0 0.0
          %1899 = vmatprep.subr.mxu0 0.0
          %1900 = vmatpush1.msra.mxu0 0.0
          %1901 = vmatprep.subr.mxu0 0.0
          %1902 = vmatpush1.msra.mxu0 0.0
          %1903 = vmatprep.subr.mxu0 0.0
          %1904 = vmatpush1.msra.mxu0 0.0
          %1905 = vmatprep.subr.mxu0 0.0
          %1906 = vmatpush1.msra.mxu0 0.0
          %1907 = vmatprep.subr.mxu0 0.0
          %1908 = vmatpush1.msra.mxu0 0.0
          %1909 = vmatprep.subr.mxu0 0.0
          %1910 = vmatpush1.msra.mxu0 0.0
          %1911 = vmatprep.subr.mxu0 0.0
          %1912 = vmatpush1.msra.mxu0 0.0
          %1913 = vmatprep.subr.mxu0 0.0
          %1914 = vmatpush1.msra.mxu0 0.0
          %1915 = vmatprep.subr.mxu0 0.0
          %1916 = vmatpush1.msra.mxu0 0.0
          %1917 = vmatprep.subr.mxu0 0.0
          %1918 = vmatpush1.msra.mxu0 0.0
          %1919 = vmatprep.subr.mxu0 0.0
          %1920 = vmatpush1.msra.mxu0 %v1884
          %1921 = vmatprep.subr.mxu0 0.0
          %1922 = vmatpush1.msra.mxu0 %v1883
          %1923 = vmatprep.subr.mxu0 0.0
          %1924 = vmatpush1.msra.mxu0 %v1882
          %1925 = vmatprep.subr.mxu0 0.0
          %1926 = vmatpush1.msra.mxu0 %v1881
          %1927 = vmatprep.subr.mxu0 0.0
          %1928 = vmatpush2.msra.mxu0 0.0
          %1929 = vmatprep.subr.mxu0 0.0
          %1930 = vmatpush2.msra.mxu0 0.0
          %1931 = vmatprep.subr.mxu0 0.0
          %1932 = vmatpush2.msra.mxu0 0.0
          %1933 = vmatprep.subr.mxu0 0.0
          %1934 = vmatpush2.msra.mxu0 0.0
          %1935 = vmatprep.subr.mxu0 0.0
          %1936 = vmatpush2.msra.mxu0 0.0
          %1937 = vmatprep.subr.mxu0 0.0
          %1938 = vmatpush2.msra.mxu0 0.0
          %1939 = vmatprep.subr.mxu0 0.0
          %1940 = vmatpush2.msra.mxu0 0.0
          %1941 = vmatprep.subr.mxu0 0.0
          %1942 = vmatpush2.msra.mxu0 0.0
          %1943 = vmatprep.subr.mxu0 0.0
          %1944 = vmatpush2.msra.mxu0 0.0
          %1945 = vmatprep.subr.mxu0 0.0
          %1946 = vmatpush2.msra.mxu0 0.0
          %1947 = vmatprep.subr.mxu0 0.0
          %1948 = vmatpush2.msra.mxu0 0.0
          %1949 = vmatprep.subr.mxu0 0.0
          %1950 = vmatpush2.msra.mxu0 0.0
          %1951 = vmatprep.subr.mxu0 0.0
          %1952 = vmatpush2.msra.mxu0 0.0
          %1953 = vmatprep.subr.mxu0 0.0
          %1954 = vmatpush2.msra.mxu0 0.0
          %1955 = vmatprep.subr.mxu0 0.0
          %1956 = vmatpush2.msra.mxu0 0.0
          %1957 = vmatprep.subr.mxu0 0.0
          %1958 = vmatpush2.msra.mxu0 0.0
          %1959 = vmatprep.mubr.f32.mxu0 0.0
          %1960 = vmatmul.mubr.f32.gmra.mxu0 %v1893
          %v1961 = vpop.f32.mrf.mxu0
          %v1962 = vadd.f32 %v1890, %v1961
          %v1963 = vpop.f32.mrf.mxu0
          %1964 = vdwg.mxu0
          %v1965 = vmax.f32 %v1962, 0.0
          %1966 = vst [vmem:[#allocation5] sm:$0xff] %v1965
        $region64: #{tpu_custom_call.1} parent=55 // pred_fallthru
          _
        // Predicated region
        $region65: #{tpu_custom_call.1} parent=55 // pred_check
          %p1967 = pneg %p228
        $region66: #{tpu_custom_call.1} parent=55 // pred_check_branch
          %1969 = sbr.rel (%p1967) target = $region68
        $region67: #{tpu_custom_call.1} parent=55 // pred_region
          %s1971 = ssub.s32 128, 128
          %1972 = vsyncadd [#allocation6], %s1971
          %s1974 = sshll.u32 [#allocation5], 4
          %s1975 = int_to_ptr.vmem [resolvable:$true] %s1974
          %1977 = dma.vmem_to_hbm [thread:$0]  %s1975, 128, %s9, [#allocation6]
        $region68: #{tpu_custom_call.1} parent=55 // pred_fallthru
          _
        // Predicated region
        $region69: #{tpu_custom_call.1} parent=55 // pred_check
          %p1978 = pneg %p228
        $region70: #{tpu_custom_call.1} parent=55 // pred_check_branch
          %1980 = sbr.rel (%p1978) target = $region72
        $region71: #{tpu_custom_call.1} parent=55 // pred_region
          %1981 = dma.done [#allocation6], 128
        $region72: #{tpu_custom_call.1} parent=55 // pred_fallthru
          _
      $region56: #{tpu_custom_call.1} parent=5 // pred_fallthru
        _
      %p1982 = scmp.le.s32.totalorder 2, %s16
      // Predicated region
      $region73: #{tpu_custom_call.1} parent=5 // pred_check
        %p1983 = pneg %p1982
      $region74: #{tpu_custom_call.1} parent=5 // pred_check_branch
        %1985 = sbr.rel (%p1983) target = $region76
      $region75: #{tpu_custom_call.1} parent=5 // pred_region
        %s1986 = ssub.s32 %s16, 2
      $region76: #{tpu_custom_call.1} parent=5 // pred_fallthru
        _
    $region6: #{tpu_custom_call.1} parent=1 // loop_footer
      %s20 = sadd.s32 1, %s16
    $region7: #{tpu_custom_call.1} parent=1 // loop_footer_branch
      %15 = sbr.rel target = $region3
    $region8: #{tpu_custom_call.1} parent=1 // loop_exit
      _
    %1987 = vsyncpa [#allocation6], 1
    %s1988 = scalar_lea.sflag [#allocation6], 1
    %1989 = vsyncpa %s1988, 1

</llo_original>
